<compile_context>
chip_gen: v7x
topology: tpu7x:2x2x1
jax: 0.10.0
libtpu: 0.0.40
codegen_flags: <defaults>
</compile_context>

<pallas_src>
import functools
import math

import jax
import jax.numpy as jnp
from jax.experimental import pallas as pl
from jax.experimental.pallas import tpu as pltpu


def _round_up(x, m):
    return (x + m - 1) // m * m


# Tile caps (MXU-filling on v6e/v7x, VMEM-safe on v7x's smaller VMEM).
_TM = 256   # rows per GEMM / LN tile
_TN = 256   # output columns per GEMM tile
_TK = 512   # contraction depth per GEMM tile
_TQ = 256   # query rows per attention tile


def _plan_lane(n, tile_max):
    """(tile, padded) for a lane (last) dim: full extent when < 128, otherwise the
    largest 128-multiple tile <= tile_max that divides the 128-padded size."""
    if n < 128:
        return n, n
    npad = _round_up(n, 128)
    for t in range(tile_max, 127, -128):
        if npad % t == 0:
            return t, npad
    return 128, npad


def _plan_sublane(m, tile_max=_TM):
    """(tile, padded) for a sublane (second-to-last) dim, 8-aligned."""
    mp = _round_up(m, 8)
    if mp <= tile_max:
        return mp, mp
    for t in range(tile_max, 63, -8):
        if mp % t == 0:
            return t, mp
    return tile_max, _round_up(mp, tile_max)


# --------------------------------------------------------------------------
# Tiled linear:  [M, K] @ [K, N] + b  (bf16 MXU operands, f32 accumulation)
# --------------------------------------------------------------------------

def prepare_linear(w, b):
    """Pad weight/bias to tile-aligned shapes and cast ONCE (outside the jit)."""
    K, N = w.shape
    _, Kp = _plan_lane(K, _TK)
    _, Np = _plan_lane(N, _TN)
    wp = w if (Kp == K and Np == N) else jnp.pad(w, ((0, Kp - K), (0, Np - N)))
    bp = b if Np == N else jnp.pad(b, (0, Np - N))
    return {"w": wp.astype(jnp.bfloat16),
            "b": bp.astype(jnp.float32).reshape(1, Np)}


def _linear_kernel(x_ref, w_ref, b_ref, o_ref, acc_ref, *, activation):
    @pl.when(pl.program_id(2) == 0)
    def _():
        acc_ref[...] = jnp.zeros_like(acc_ref)

    acc_ref[...] += jnp.dot(x_ref[...], w_ref[...],
                            preferred_element_type=jnp.float32)

    @pl.when(pl.program_id(2) == pl.num_programs(2) - 1)
    def _():
        y = acc_ref[...] + b_ref[...]
        if activation == "gelu":
            # TODO(synk): reference BERT may use erf-GELU; tanh-approx kept here.
            y = jax.nn.gelu(y, approximate=True)
        o_ref[...] = y.astype(o_ref.dtype)


def linear(x, prep, n_out, activation=None, out_dtype=jnp.float32):
    """x: [M, K] @ prepared weight -> [M, n_out]."""
    M, K = x.shape
    wp, bp = prep["w"], prep["b"]
    Kp, Np = wp.shape
    tk, _ = _plan_lane(Kp, _TK)
    tn, _ = _plan_lane(Np, _TN)
    tm, Mp = _plan_sublane(M, _TM)

    xp = x
    if Mp != M or Kp != K:
        xp = jnp.pad(x, ((0, Mp - M), (0, Kp - K)))
    xp = xp.astype(jnp.bfloat16)

    out = pl.pallas_call(
        functools.partial(_linear_kernel, activation=activation),
        out_shape=jax.ShapeDtypeStruct((Mp, Np), out_dtype),
        grid=(Mp // tm, Np // tn, Kp // tk),
        in_specs=[
            pl.BlockSpec((tm, tk), lambda i, j, k: (i, k)),
            pl.BlockSpec((tk, tn), lambda i, j, k: (k, j)),
            pl.BlockSpec((1, tn), lambda i, j, k: (0, j)),
        ],
        out_specs=pl.BlockSpec((tm, tn), lambda i, j, k: (i, j)),
        scratch_shapes=[pltpu.VMEM((tm, tn), jnp.float32)],
        compiler_params=pltpu.CompilerParams(
            dimension_semantics=("parallel", "parallel", "arbitrary")),
    )(xp, wp, bp)
    if Mp != M or Np != n_out:
        out = out[:M, :n_out]
    return out


# --------------------------------------------------------------------------
# Layer norm (optionally fused with a bf16 residual add), tiled over rows
# --------------------------------------------------------------------------

def _layernorm_kernel(x_ref, g_ref, b_ref, o_ref, *, eps):
    x = x_ref[...]
    mu = jnp.mean(x, axis=-1, keepdims=True)
    var = jnp.mean(jnp.square(x - mu), axis=-1, keepdims=True)
    y = (x - mu) * jax.lax.rsqrt(var + eps)
    o_ref[...] = (y * g_ref[...] + b_ref[...]).astype(o_ref.dtype)


def _add_layernorm_kernel(x_ref, r_ref, g_ref, b_ref, o_ref, *, eps):
    # Residual add fused in-kernel; math in f32 even if the residual is bf16.
    x = x_ref[...] + r_ref[...].astype(jnp.float32)
    mu = jnp.mean(x, axis=-1, keepdims=True)
    var = jnp.mean(jnp.square(x - mu), axis=-1, keepdims=True)
    y = (x - mu) * jax.lax.rsqrt(var + eps)
    o_ref[...] = (y * g_ref[...] + b_ref[...]).astype(o_ref.dtype)


def layer_norm(x, gamma, beta, eps, residual=None):
    """LN(x [+ residual]): x [M, D] f32 (residual may be bf16) -> [M, D] f32."""
    M, D = x.shape
    tm, Mp = _plan_sublane(M, _TM)

    xs = [x if Mp == M else jnp.pad(x, ((0, Mp - M), (0, 0)))]
    if residual is not None:
        r = residual if Mp == M else jnp.pad(residual, ((0, Mp - M), (0, 0)))
        xs.append(r)
    kernel = _layernorm_kernel if residual is None else _add_layernorm_kernel

    out = pl.pallas_call(
        functools.partial(kernel, eps=eps),
        out_shape=jax.ShapeDtypeStruct((Mp, D), jnp.float32),
        grid=(Mp // tm,),
        in_specs=[pl.BlockSpec((tm, D), lambda i: (i, 0))] * len(xs)
                 + [pl.BlockSpec((1, D), lambda i: (0, 0)),
                    pl.BlockSpec((1, D), lambda i: (0, 0))],
        out_specs=pl.BlockSpec((tm, D), lambda i: (i, 0)),
        compiler_params=pltpu.CompilerParams(
            dimension_semantics=("parallel",)),
    )(*xs, gamma.reshape(1, D), beta.reshape(1, D))
    return out if Mp == M else out[:M]


# --------------------------------------------------------------------------
# Multi-head self attention, grid = (batch, query-block), all heads per step
# --------------------------------------------------------------------------

def _attention_kernel(q_ref, kv_ref, bias_ref, o_ref, *, n_heads, head_dim, scale):
    bias = bias_ref[0]                          # (1, S) f32, broadcasts over rows
    D = n_heads * head_dim
    ctx_heads = []
    for h in range(n_heads):
        # Slice the *refs*: plain vld of only the needed columns (no big
        # in-register value slicing).
        q = q_ref[0, :, h * head_dim:(h + 1) * head_dim]                 # (tq, Dh) bf16
        k = kv_ref[0, :, D + h * head_dim:D + (h + 1) * head_dim]        # (S,  Dh) bf16
        v = kv_ref[0, :, 2 * D + h * head_dim:2 * D + (h + 1) * head_dim]
        # Contract on Dh directly (no in-kernel transpose); f32 scores & softmax.
        s = jax.lax.dot_general(
            q, k, dimension_numbers=(((1,), (1,)), ((), ())),
            preferred_element_type=jnp.float32) * scale + bias
        m = jnp.max(s, axis=-1, keepdims=True)
        p = jnp.exp(s - m)
        p = p * pl.reciprocal(jnp.sum(p, axis=-1, keepdims=True), approx=True)
        ctx_heads.append(jnp.dot(p.astype(jnp.bfloat16), v,
                                 preferred_element_type=jnp.float32))
    # TODO(synk): heads could be batched into one dot_general for better MXU fill.
    # Single full-width lane-dense store (no per-head partial stores).
    o_ref[0] = jnp.concatenate(ctx_heads, axis=-1).astype(o_ref.dtype)


def multi_head_attention(qkv, bias, n_heads, scale):
    """qkv: [B, S, 3D] bf16 fused projections, bias: [B, 1, S] f32 -> [B, S, D] bf16."""
    B, S, D3 = qkv.shape
    D = D3 // 3
    head_dim = D // n_heads
    if S % _TQ == 0:
        tq = _TQ
    elif S % 128 == 0:
        tq = 128
    else:
        tq = S
    return pl.pallas_call(
        functools.partial(_attention_kernel, n_heads=n_heads,
                          head_dim=head_dim, scale=scale),
        out_shape=jax.ShapeDtypeStruct((B, S, D), jnp.bfloat16),
        grid=(B, S // tq),
        in_specs=[
            pl.BlockSpec((1, tq, D3), lambda b, qi: (b, qi, 0)),  # query rows
            pl.BlockSpec((1, S, D3), lambda b, qi: (b, 0, 0)),    # full-length K/V
            pl.BlockSpec((1, 1, S), lambda b, qi: (b, 0, 0)),
        ],
        out_specs=pl.BlockSpec((1, tq, D), lambda b, qi: (b, qi, 0)),
        compiler_params=pltpu.CompilerParams(
            dimension_semantics=("parallel", "parallel")),
    )(qkv, qkv, bias)


# --------------------------------------------------------------------------
# Parameter construction (deterministic, synthetic); weights prepared ONCE
# --------------------------------------------------------------------------

def init_params(key, cfg):
    D = cfg["hidden_dim"]
    I = cfg["intermediate_size"]

    def dense(k, fan_in, fan_out):
        kw, _ = jax.random.split(k)
        w = 0.02 * jax.random.normal(kw, (fan_in, fan_out), jnp.float32)
        b = jnp.zeros((fan_out,), jnp.float32)
        return w, b

    keys = jax.random.split(key, 5 + cfg["n_hidden_layers"])
    params = {
        "word_emb": 0.02 * jax.random.normal(keys[0], (cfg["n_tokens"], D), jnp.float32),
        "pos_emb": 0.02 * jax.random.normal(keys[1], (cfg["max_seq_len"], D), jnp.float32),
        "type_emb": 0.02 * jax.random.normal(keys[2], (cfg["n_token_types"], D), jnp.float32),
        "emb_ln_g": jnp.ones((D,), jnp.float32),
        "emb_ln_b": jnp.zeros((D,), jnp.float32),
        "layers": [],
    }
    for li in range(cfg["n_hidden_layers"]):
        lk = jax.random.split(keys[3 + li], 6)
        wq, bq = dense(lk[0], D, D)
        wk, bk = dense(lk[1], D, D)
        wv, bv = dense(lk[2], D, D)
        wo, bo = dense(lk[3], D, D)
        w1, b1 = dense(lk[4], D, I)
        w2, b2 = dense(lk[5], I, D)
        params["layers"].append({
            # Fused Q|K|V projection; all weights padded/cast once, here.
            "qkv": prepare_linear(jnp.concatenate([wq, wk, wv], axis=1),
                                  jnp.concatenate([bq, bk, bv], axis=0)),
            "out": prepare_linear(wo, bo),
            "ln1_g": jnp.ones((D,), jnp.float32), "ln1_b": jnp.zeros((D,), jnp.float32),
            "ffn1": prepare_linear(w1, b1),
            "ffn2": prepare_linear(w2, b2),
            "ln2_g": jnp.ones((D,), jnp.float32), "ln2_b": jnp.zeros((D,), jnp.float32),
        })
    w_tag, b_tag = dense(keys[-2], D, cfg["n_tags"])
    params["tag"] = prepare_linear(w_tag, b_tag)
    return params


# --------------------------------------------------------------------------
# PLMTG forward: BERT encoder -> hidden2tag logits
# --------------------------------------------------------------------------

def plmtg_forward(params, inputs, mask, cfg):
    B, S = inputs.shape
    D = cfg["hidden_dim"]
    I = cfg["intermediate_size"]
    H = cfg["n_heads"]
    Dh = D // H
    eps = cfg["layer_norm_eps"]

    # Embeddings (gathers are glue; normalization runs in the Pallas LN kernel).
    x = (params["word_emb"][inputs]
         + params["pos_emb"][:S][None, :, :]
         + params["type_emb"][0][None, None, :])                 # [B, S, D]
    x = layer_norm(x.reshape(B * S, D), params["emb_ln_g"], params["emb_ln_b"], eps)
    # TODO(synk): attn/hidden dropout are identity at inference time; not implemented.

    # Additive attention-mask bias: 0 for valid tokens, -1e4 for padding.
    if mask is None:
        mask = jnp.ones((B, S), jnp.float32)
    bias = ((1.0 - mask.astype(jnp.float32)) * -1e4).reshape(B, 1, S)

    scale = 1.0 / math.sqrt(Dh)
    for layer in params["layers"]:
        qkv = linear(x, layer["qkv"], 3 * D, out_dtype=jnp.bfloat16)   # [B*S, 3D] bf16
        ctx = multi_head_attention(qkv.reshape(B, S, 3 * D), bias, H, scale)
        attn_out = linear(ctx.reshape(B * S, D), layer["out"], D,
                          out_dtype=jnp.bfloat16)
        x = layer_norm(x, layer["ln1_g"], layer["ln1_b"], eps, residual=attn_out)
        h = linear(x, layer["ffn1"], I, activation="gelu",
                   out_dtype=jnp.bfloat16)                              # bf16 intermediate
        ffn_out = linear(h, layer["ffn2"], D, out_dtype=jnp.bfloat16)
        x = layer_norm(x, layer["ln2_g"], layer["ln2_b"], eps, residual=ffn_out)

    logits = linear(x, params["tag"], cfg["n_tags"])
    return logits.reshape(B, S, cfg["n_tags"])


# --------------------------------------------------------------------------
# Main
# --------------------------------------------------------------------------

if __name__ == "__main__":
    cfg = dict(
        n_tokens=100,
        token_dim=32,
        max_seq_len=16,
        n_token_types=2,
        n_heads=4,
        intermediate_size=64,
        n_hidden_layers=2,
        n_tags=5,
        hidden_dim=32,
        pad_id=0,
        layer_norm_eps=1e-12,
    )

    key = jax.random.PRNGKey(0)
    pkey, ikey = jax.random.split(key)
    params = init_params(pkey, cfg)

    B, S = 2, 8
    inputs = jax.random.randint(ikey, (B, S), 1, cfg["n_tokens"], dtype=jnp.int32)
    # Pad the tail of the second sequence.
    inputs = inputs.at[1, 6:].set(cfg["pad_id"])
    mask = (inputs != cfg["pad_id"]).astype(jnp.int32)

    fwd = jax.jit(lambda p, i, m: plmtg_forward(p, i, m, cfg))
    logits = fwd(params, inputs, mask)
    jax.block_until_ready(logits)
    assert logits.shape == (B, S, cfg["n_tags"])
    print("KERNEL_OK")
</pallas_src>

<mosaic_0001>
module attributes {stable_mosaic.version = 11 : i64} {
  func.func @_layernorm_kernel(%arg0: i32, %arg1: memref<16x32xf32, #tpu.memory_space<vmem>>, %arg2: memref<1x32xf32, #tpu.memory_space<vmem>>, %arg3: memref<1x32xf32, #tpu.memory_space<vmem>>, %arg4: memref<16x32xf32, #tpu.memory_space<vmem>>) attributes {dimension_semantics = [#tpu.dimension_semantics<parallel>], iteration_bounds = array<i64: 1>, scalar_prefetch = 0 : i64, scratch_operands = 0 : i64, tpu.core_type = #tpu.core_type<tc>, window_params = [{transform_indices = @transform_0, window_bounds = array<i64: 16, 32>}, {pipeline_mode = #tpu.pipeline_mode<synchronous>, transform_indices = @transform_1, window_bounds = array<i64: 1, 32>}, {pipeline_mode = #tpu.pipeline_mode<synchronous>, transform_indices = @transform_2, window_bounds = array<i64: 1, 32>}, {transform_indices = @transform_3, window_bounds = array<i64: 16, 32>}]} {
    %c0 = arith.constant 0 : index
    %c0_0 = arith.constant 0 : index
    %0 = vector.load %arg1[%c0, %c0_0] : memref<16x32xf32, #tpu.memory_space<vmem>>, vector<16x32xf32>
    %cst = arith.constant dense<0.000000e+00> : vector<16xf32>
    %1 = vector.multi_reduction <add>, %0, %cst [1] : vector<16x32xf32> to vector<16xf32>
    %2 = vector.shape_cast %1 : vector<16xf32> to vector<16x1xf32>
    %cst_1 = arith.constant 3.200000e+01 : f32
    %3 = vector.broadcast %cst_1 : f32 to vector<16x1xf32>
    %4 = arith.divf %2, %3 : vector<16x1xf32>
    %5 = vector.broadcast %4 : vector<16x1xf32> to vector<16x32xf32>
    %6 = arith.subf %0, %5 : vector<16x32xf32>
    %7 = arith.mulf %6, %6 : vector<16x32xf32>
    %cst_2 = arith.constant dense<0.000000e+00> : vector<16xf32>
    %8 = vector.multi_reduction <add>, %7, %cst_2 [1] : vector<16x32xf32> to vector<16xf32>
    %9 = vector.shape_cast %8 : vector<16xf32> to vector<16x1xf32>
    %cst_3 = arith.constant 3.200000e+01 : f32
    %10 = vector.broadcast %cst_3 : f32 to vector<16x1xf32>
    %11 = arith.divf %9, %10 : vector<16x1xf32>
    %12 = vector.broadcast %4 : vector<16x1xf32> to vector<16x32xf32>
    %13 = arith.subf %0, %12 : vector<16x32xf32>
    %cst_4 = arith.constant 9.99999996E-13 : f32
    %14 = vector.broadcast %cst_4 : f32 to vector<16x1xf32>
    %15 = arith.addf %11, %14 : vector<16x1xf32>
    %16 = math.rsqrt %15 : vector<16x1xf32>
    %17 = vector.broadcast %16 : vector<16x1xf32> to vector<16x32xf32>
    %18 = arith.mulf %13, %17 : vector<16x32xf32>
    %c0_5 = arith.constant 0 : index
    %c0_6 = arith.constant 0 : index
    %19 = vector.load %arg2[%c0_5, %c0_6] : memref<1x32xf32, #tpu.memory_space<vmem>>, vector<1x32xf32>
    %20 = vector.broadcast %19 : vector<1x32xf32> to vector<16x32xf32>
    %21 = arith.mulf %18, %20 : vector<16x32xf32>
    %c0_7 = arith.constant 0 : index
    %c0_8 = arith.constant 0 : index
    %22 = vector.load %arg3[%c0_7, %c0_8] : memref<1x32xf32, #tpu.memory_space<vmem>>, vector<1x32xf32>
    %23 = vector.broadcast %22 : vector<1x32xf32> to vector<16x32xf32>
    %24 = arith.addf %21, %23 : vector<16x32xf32>
    %c0_9 = arith.constant 0 : index
    %c0_10 = arith.constant 0 : index
    %25 = vector.load %arg4[%c0_9, %c0_10] : memref<16x32xf32, #tpu.memory_space<vmem>>, vector<16x32xf32>
    tpu.vector_store %arg4[%c0_9, %c0_10], %24 {strides = array<i32>} : memref<16x32xf32, #tpu.memory_space<vmem>>, vector<16x32xf32>,
    return
  }
  func.func @transform_0(%arg0: i32) -> (i32, i32) {
    %c0_i32 = arith.constant 0 : i32
    %c0_i32_0 = arith.constant 0 : i32
    return %arg0, %c0_i32 : i32, i32
  }
  func.func @transform_1(%arg0: i32) -> (i32, i32) {
    %c0_i32 = arith.constant 0 : i32
    %c0_i32_0 = arith.constant 0 : i32
    %c0_i32_1 = arith.constant 0 : i32
    return %c0_i32, %c0_i32_0 : i32, i32
  }
  func.func @transform_2(%arg0: i32) -> (i32, i32) {
    %c0_i32 = arith.constant 0 : i32
    %c0_i32_0 = arith.constant 0 : i32
    %c0_i32_1 = arith.constant 0 : i32
    return %c0_i32, %c0_i32_0 : i32, i32
  }
  func.func @transform_3(%arg0: i32) -> (i32, i32) {
    %c0_i32 = arith.constant 0 : i32
    %c0_i32_0 = arith.constant 0 : i32
    return %arg0, %c0_i32 : i32, i32
  }
}

module attributes {stable_mosaic.version = 11 : i64} {
  func.func @_linear_kernel(%arg0: i32, %arg1: i32, %arg2: i32, %arg3: memref<16x32xbf16, #tpu.memory_space<vmem>>, %arg4: memref<32x96xbf16, #tpu.memory_space<vmem>>, %arg5: memref<1x96xf32, #tpu.memory_space<vmem>>, %arg6: memref<16x96xbf16, #tpu.memory_space<vmem>>, %arg7: memref<16x96xf32, #tpu.memory_space<vmem>>) attributes {dimension_semantics = [#tpu.dimension_semantics<parallel>, #tpu.dimension_semantics<parallel>, #tpu.dimension_semantics<arbitrary>], iteration_bounds = array<i64: 1, 1, 1>, scalar_prefetch = 0 : i64, scratch_operands = 1 : i64, tpu.core_type = #tpu.core_type<tc>, window_params = [{transform_indices = @transform_0, window_bounds = array<i64: 16, 32>}, {transform_indices = @transform_1, window_bounds = array<i64: 32, 96>}, {transform_indices = @transform_2, window_bounds = array<i64: 1, 96>}, {transform_indices = @transform_3, window_bounds = array<i64: 16, 96>}]} {
    %c0_i32 = arith.constant 0 : i32
    %0 = arith.cmpi eq, %arg2, %c0_i32 : i32
    %1 = arith.extui %0 : i1 to i32
    %c0_i32_0 = arith.constant 0 : i32
    %2 = arith.cmpi ne, %1, %c0_i32_0 : i32
    scf.if %2 {
      %cst_10 = arith.constant 0.000000e+00 : f32
      %12 = vector.broadcast %cst_10 : f32 to vector<16x96xf32>
      %c0_11 = arith.constant 0 : index
      %c0_12 = arith.constant 0 : index
      %13 = vector.load %arg7[%c0_11, %c0_12] : memref<16x96xf32, #tpu.memory_space<vmem>>, vector<16x96xf32>
      tpu.vector_store %arg7[%c0_11, %c0_12], %12 {strides = array<i32>} : memref<16x96xf32, #tpu.memory_space<vmem>>, vector<16x96xf32>,
    } else {
    }
    %c0 = arith.constant 0 : index
    %c0_1 = arith.constant 0 : index
    %3 = vector.load %arg7[%c0, %c0_1] : memref<16x96xf32, #tpu.memory_space<vmem>>, vector<16x96xf32>
    %c0_2 = arith.constant 0 : index
    %c0_3 = arith.constant 0 : index
    %4 = vector.load %arg3[%c0_2, %c0_3] : memref<16x32xbf16, #tpu.memory_space<vmem>>, vector<16x32xbf16>
    %c0_4 = arith.constant 0 : index
    %c0_5 = arith.constant 0 : index
    %5 = vector.load %arg4[%c0_4, %c0_5] : memref<32x96xbf16, #tpu.memory_space<vmem>>, vector<32x96xbf16>
    %cst = arith.constant dense<0.000000e+00> : vector<16x96xf32>
    %6 = tpu.matmul %4, %5, %cst {dimension_numbers = #tpu.dot_dimension_numbers<[1], [0], [0], [1], [0, 0, 1, 1], [], []>} : vector<16x32xbf16>, vector<32x96xbf16>, vector<16x96xf32> -> vector<16x96xf32>
    %7 = arith.addf %3, %6 : vector<16x96xf32>
    %c0_6 = arith.constant 0 : index
    %c0_7 = arith.constant 0 : index
    %8 = vector.load %arg7[%c0_6, %c0_7] : memref<16x96xf32, #tpu.memory_space<vmem>>, vector<16x96xf32>
    tpu.vector_store %arg7[%c0_6, %c0_7], %7 {strides = array<i32>} : memref<16x96xf32, #tpu.memory_space<vmem>>, vector<16x96xf32>,
    %c0_i32_8 = arith.constant 0 : i32
    %9 = arith.cmpi eq, %arg2, %c0_i32_8 : i32
    %10 = arith.extui %9 : i1 to i32
    %c0_i32_9 = arith.constant 0 : i32
    %11 = arith.cmpi ne, %10, %c0_i32_9 : i32
    scf.if %11 {
      %c0_10 = arith.constant 0 : index
      %c0_11 = arith.constant 0 : index
      %12 = vector.load %arg7[%c0_10, %c0_11] : memref<16x96xf32, #tpu.memory_space<vmem>>, vector<16x96xf32>
      %c0_12 = arith.constant 0 : index
      %c0_13 = arith.constant 0 : index
      %13 = vector.load %arg5[%c0_12, %c0_13] : memref<1x96xf32, #tpu.memory_space<vmem>>, vector<1x96xf32>
      %14 = vector.broadcast %13 : vector<1x96xf32> to vector<16x96xf32>
      %15 = arith.addf %12, %14 : vector<16x96xf32>
      %16 = arith.truncf %15 : vector<16x96xf32> to vector<16x96xbf16>
      %c0_14 = arith.constant 0 : index
      %c0_15 = arith.constant 0 : index
      %17 = vector.load %arg6[%c0_14, %c0_15] : memref<16x96xbf16, #tpu.memory_space<vmem>>, vector<16x96xbf16>
      tpu.vector_store %arg6[%c0_14, %c0_15], %16 {strides = array<i32>} : memref<16x96xbf16, #tpu.memory_space<vmem>>, vector<16x96xbf16>,
    } else {
    }
    return
  }
  func.func @transform_0(%arg0: i32, %arg1: i32, %arg2: i32) -> (i32, i32) {
    %c0_i32 = arith.constant 0 : i32
    return %arg0, %arg2 : i32, i32
  }
  func.func @transform_1(%arg0: i32, %arg1: i32, %arg2: i32) -> (i32, i32) {
    %c0_i32 = arith.constant 0 : i32
    return %arg2, %arg1 : i32, i32
  }
  func.func @transform_2(%arg0: i32, %arg1: i32, %arg2: i32) -> (i32, i32) {
    %c0_i32 = arith.constant 0 : i32
    %c0_i32_0 = arith.constant 0 : i32
    return %c0_i32, %arg1 : i32, i32
  }
  func.func @transform_3(%arg0: i32, %arg1: i32, %arg2: i32) -> (i32, i32) {
    %c0_i32 = arith.constant 0 : i32
    return %arg0, %arg1 : i32, i32
  }
}

module attributes {stable_mosaic.version = 11 : i64} {
  func.func @_attention_kernel(%arg0: i32, %arg1: i32, %arg2: memref<1x8x96xbf16, #tpu.memory_space<vmem>>, %arg3: memref<1x8x96xbf16, #tpu.memory_space<vmem>>, %arg4: memref<1x1x8xf32, #tpu.memory_space<vmem>>, %arg5: memref<1x8x32xbf16, #tpu.memory_space<vmem>>) attributes {dimension_semantics = [#tpu.dimension_semantics<parallel>, #tpu.dimension_semantics<parallel>], iteration_bounds = array<i64: 2, 1>, scalar_prefetch = 0 : i64, scratch_operands = 0 : i64, tpu.core_type = #tpu.core_type<tc>, window_params = [{transform_indices = @transform_0, window_bounds = array<i64: 1, 8, 96>}, {transform_indices = @transform_1, window_bounds = array<i64: 1, 8, 96>}, {transform_indices = @transform_2, window_bounds = array<i64: 1, 1, 8>}, {transform_indices = @transform_3, window_bounds = array<i64: 1, 8, 32>}]} {
    %c0 = arith.constant 0 : index
    %c0_0 = arith.constant 0 : index
    %c0_1 = arith.constant 0 : index
    %0 = vector.load %arg4[%c0, %c0_0, %c0_1] : memref<1x1x8xf32, #tpu.memory_space<vmem>>, vector<1x1x8xf32>
    %1 = vector.shape_cast %0 : vector<1x1x8xf32> to vector<1x8xf32>
    %c0_2 = arith.constant 0 : index
    %c0_3 = arith.constant 0 : index
    %c0_4 = arith.constant 0 : index
    %2 = vector.load %arg2[%c0_2, %c0_3, %c0_4] : memref<1x8x96xbf16, #tpu.memory_space<vmem>>, vector<1x8x8xbf16>
    %3 = vector.shape_cast %2 : vector<1x8x8xbf16> to vector<8x8xbf16>
    %c0_5 = arith.constant 0 : index
    %c0_6 = arith.constant 0 : index
    %c32 = arith.constant 32 : index
    %4 = vector.load %arg3[%c0_5, %c0_6, %c32] : memref<1x8x96xbf16, #tpu.memory_space<vmem>>, vector<1x8x8xbf16>
    %5 = vector.shape_cast %4 : vector<1x8x8xbf16> to vector<8x8xbf16>
    %c0_7 = arith.constant 0 : index
    %c0_8 = arith.constant 0 : index
    %c64 = arith.constant 64 : index
    %6 = vector.load %arg3[%c0_7, %c0_8, %c64] : memref<1x8x96xbf16, #tpu.memory_space<vmem>>, vector<1x8x8xbf16>
    %7 = vector.shape_cast %6 : vector<1x8x8xbf16> to vector<8x8xbf16>
    %cst = arith.constant dense<0.000000e+00> : vector<8x8xf32>
    %8 = tpu.matmul %3, %5, %cst {dimension_numbers = #tpu.dot_dimension_numbers<[1], [1], [0], [0], [0, 0, 1, 0], [], []>} : vector<8x8xbf16>, vector<8x8xbf16>, vector<8x8xf32> -> vector<8x8xf32>
    %cst_9 = arith.constant 0.353553385 : f32
    %9 = vector.broadcast %cst_9 : f32 to vector<8x8xf32>
    %10 = arith.mulf %8, %9 : vector<8x8xf32>
    %11 = vector.broadcast %1 : vector<1x8xf32> to vector<8x8xf32>
    %12 = arith.addf %10, %11 : vector<8x8xf32>
    %cst_10 = arith.constant dense<0xFF800000> : vector<8xf32>
    %13 = vector.multi_reduction <maximumf>, %12, %cst_10 [1] : vector<8x8xf32> to vector<8xf32>
    %14 = vector.shape_cast %13 : vector<8xf32> to vector<8x1xf32>
    %15 = vector.broadcast %14 : vector<8x1xf32> to vector<8x8xf32>
    %16 = arith.subf %12, %15 : vector<8x8xf32>
    %17 = math.exp %16 : vector<8x8xf32>
    %cst_11 = arith.constant dense<0.000000e+00> : vector<8xf32>
    %18 = vector.multi_reduction <add>, %17, %cst_11 [1] : vector<8x8xf32> to vector<8xf32>
    %19 = vector.shape_cast %18 : vector<8xf32> to vector<8x1xf32>
    %20 = tpu.reciprocal %19 {approx = true} : vector<8x1xf32> -> vector<8x1xf32>
    %21 = vector.broadcast %20 : vector<8x1xf32> to vector<8x8xf32>
    %22 = arith.mulf %17, %21 : vector<8x8xf32>
    %23 = arith.truncf %22 : vector<8x8xf32> to vector<8x8xbf16>
    %cst_12 = arith.constant dense<0.000000e+00> : vector<8x8xf32>
    %24 = tpu.matmul %23, %7, %cst_12 {dimension_numbers = #tpu.dot_dimension_numbers<[1], [0], [0], [1], [0, 0, 1, 1], [], []>} : vector<8x8xbf16>, vector<8x8xbf16>, vector<8x8xf32> -> vector<8x8xf32>
    %c0_13 = arith.constant 0 : index
    %c0_14 = arith.constant 0 : index
    %c8 = arith.constant 8 : index
    %25 = vector.load %arg2[%c0_13, %c0_14, %c8] : memref<1x8x96xbf16, #tpu.memory_space<vmem>>, vector<1x8x8xbf16>
    %26 = vector.shape_cast %25 : vector<1x8x8xbf16> to vector<8x8xbf16>
    %c0_15 = arith.constant 0 : index
    %c0_16 = arith.constant 0 : index
    %c40 = arith.constant 40 : index
    %27 = vector.load %arg3[%c0_15, %c0_16, %c40] : memref<1x8x96xbf16, #tpu.memory_space<vmem>>, vector<1x8x8xbf16>
    %28 = vector.shape_cast %27 : vector<1x8x8xbf16> to vector<8x8xbf16>
    %c0_17 = arith.constant 0 : index
    %c0_18 = arith.constant 0 : index
    %c72 = arith.constant 72 : index
    %29 = vector.load %arg3[%c0_17, %c0_18, %c72] : memref<1x8x96xbf16, #tpu.memory_space<vmem>>, vector<1x8x8xbf16>
    %30 = vector.shape_cast %29 : vector<1x8x8xbf16> to vector<8x8xbf16>
    %cst_19 = arith.constant dense<0.000000e+00> : vector<8x8xf32>
    %31 = tpu.matmul %26, %28, %cst_19 {dimension_numbers = #tpu.dot_dimension_numbers<[1], [1], [0], [0], [0, 0, 1, 0], [], []>} : vector<8x8xbf16>, vector<8x8xbf16>, vector<8x8xf32> -> vector<8x8xf32>
    %cst_20 = arith.constant 0.353553385 : f32
    %32 = vector.broadcast %cst_20 : f32 to vector<8x8xf32>
    %33 = arith.mulf %31, %32 : vector<8x8xf32>
    %34 = vector.broadcast %1 : vector<1x8xf32> to vector<8x8xf32>
    %35 = arith.addf %33, %34 : vector<8x8xf32>
    %cst_21 = arith.constant dense<0xFF800000> : vector<8xf32>
    %36 = vector.multi_reduction <maximumf>, %35, %cst_21 [1] : vector<8x8xf32> to vector<8xf32>
    %37 = vector.shape_cast %36 : vector<8xf32> to vector<8x1xf32>
    %38 = vector.broadcast %37 : vector<8x1xf32> to vector<8x8xf32>
    %39 = arith.subf %35, %38 : vector<8x8xf32>
    %40 = math.exp %39 : vector<8x8xf32>
    %cst_22 = arith.constant dense<0.000000e+00> : vector<8xf32>
    %41 = vector.multi_reduction <add>, %40, %cst_22 [1] : vector<8x8xf32> to vector<8xf32>
    %42 = vector.shape_cast %41 : vector<8xf32> to vector<8x1xf32>
    %43 = tpu.reciprocal %42 {approx = true} : vector<8x1xf32> -> vector<8x1xf32>
    %44 = vector.broadcast %43 : vector<8x1xf32> to vector<8x8xf32>
    %45 = arith.mulf %40, %44 : vector<8x8xf32>
    %46 = arith.truncf %45 : vector<8x8xf32> to vector<8x8xbf16>
    %cst_23 = arith.constant dense<0.000000e+00> : vector<8x8xf32>
    %47 = tpu.matmul %46, %30, %cst_23 {dimension_numbers = #tpu.dot_dimension_numbers<[1], [0], [0], [1], [0, 0, 1, 1], [], []>} : vector<8x8xbf16>, vector<8x8xbf16>, vector<8x8xf32> -> vector<8x8xf32>
    %c0_24 = arith.constant 0 : index
    %c0_25 = arith.constant 0 : index
    %c16 = arith.constant 16 : index
    %48 = vector.load %arg2[%c0_24, %c0_25, %c16] : memref<1x8x96xbf16, #tpu.memory_space<vmem>>, vector<1x8x8xbf16>
    %49 = vector.shape_cast %48 : vector<1x8x8xbf16> to vector<8x8xbf16>
    %c0_26 = arith.constant 0 : index
    %c0_27 = arith.constant 0 : index
    %c48 = arith.constant 48 : index
    %50 = vector.load %arg3[%c0_26, %c0_27, %c48] : memref<1x8x96xbf16, #tpu.memory_space<vmem>>, vector<1x8x8xbf16>
    %51 = vector.shape_cast %50 : vector<1x8x8xbf16> to vector<8x8xbf16>
    %c0_28 = arith.constant 0 : index
    %c0_29 = arith.constant 0 : index
    %c80 = arith.constant 80 : index
    %52 = vector.load %arg3[%c0_28, %c0_29, %c80] : memref<1x8x96xbf16, #tpu.memory_space<vmem>>, vector<1x8x8xbf16>
    %53 = vector.shape_cast %52 : vector<1x8x8xbf16> to vector<8x8xbf16>
    %cst_30 = arith.constant dense<0.000000e+00> : vector<8x8xf32>
    %54 = tpu.matmul %49, %51, %cst_30 {dimension_numbers = #tpu.dot_dimension_numbers<[1], [1], [0], [0], [0, 0, 1, 0], [], []>} : vector<8x8xbf16>, vector<8x8xbf16>, vector<8x8xf32> -> vector<8x8xf32>
    %cst_31 = arith.constant 0.353553385 : f32
    %55 = vector.broadcast %cst_31 : f32 to vector<8x8xf32>
    %56 = arith.mulf %54, %55 : vector<8x8xf32>
    %57 = vector.broadcast %1 : vector<1x8xf32> to vector<8x8xf32>
    %58 = arith.addf %56, %57 : vector<8x8xf32>
    %cst_32 = arith.constant dense<0xFF800000> : vector<8xf32>
    %59 = vector.multi_reduction <maximumf>, %58, %cst_32 [1] : vector<8x8xf32> to vector<8xf32>
    %60 = vector.shape_cast %59 : vector<8xf32> to vector<8x1xf32>
    %61 = vector.broadcast %60 : vector<8x1xf32> to vector<8x8xf32>
    %62 = arith.subf %58, %61 : vector<8x8xf32>
    %63 = math.exp %62 : vector<8x8xf32>
    %cst_33 = arith.constant dense<0.000000e+00> : vector<8xf32>
    %64 = vector.multi_reduction <add>, %63, %cst_33 [1] : vector<8x8xf32> to vector<8xf32>
    %65 = vector.shape_cast %64 : vector<8xf32> to vector<8x1xf32>
    %66 = tpu.reciprocal %65 {approx = true} : vector<8x1xf32> -> vector<8x1xf32>
    %67 = vector.broadcast %66 : vector<8x1xf32> to vector<8x8xf32>
    %68 = arith.mulf %63, %67 : vector<8x8xf32>
    %69 = arith.truncf %68 : vector<8x8xf32> to vector<8x8xbf16>
    %cst_34 = arith.constant dense<0.000000e+00> : vector<8x8xf32>
    %70 = tpu.matmul %69, %53, %cst_34 {dimension_numbers = #tpu.dot_dimension_numbers<[1], [0], [0], [1], [0, 0, 1, 1], [], []>} : vector<8x8xbf16>, vector<8x8xbf16>, vector<8x8xf32> -> vector<8x8xf32>
    %c0_35 = arith.constant 0 : index
    %c0_36 = arith.constant 0 : index
    %c24 = arith.constant 24 : index
    %71 = vector.load %arg2[%c0_35, %c0_36, %c24] : memref<1x8x96xbf16, #tpu.memory_space<vmem>>, vector<1x8x8xbf16>
    %72 = vector.shape_cast %71 : vector<1x8x8xbf16> to vector<8x8xbf16>
    %c0_37 = arith.constant 0 : index
    %c0_38 = arith.constant 0 : index
    %c56 = arith.constant 56 : index
    %73 = vector.load %arg3[%c0_37, %c0_38, %c56] : memref<1x8x96xbf16, #tpu.memory_space<vmem>>, vector<1x8x8xbf16>
    %74 = vector.shape_cast %73 : vector<1x8x8xbf16> to vector<8x8xbf16>
    %c0_39 = arith.constant 0 : index
    %c0_40 = arith.constant 0 : index
    %c88 = arith.constant 88 : index
    %75 = vector.load %arg3[%c0_39, %c0_40, %c88] : memref<1x8x96xbf16, #tpu.memory_space<vmem>>, vector<1x8x8xbf16>
    %76 = vector.shape_cast %75 : vector<1x8x8xbf16> to vector<8x8xbf16>
    %cst_41 = arith.constant dense<0.000000e+00> : vector<8x8xf32>
    %77 = tpu.matmul %72, %74, %cst_41 {dimension_numbers = #tpu.dot_dimension_numbers<[1], [1], [0], [0], [0, 0, 1, 0], [], []>} : vector<8x8xbf16>, vector<8x8xbf16>, vector<8x8xf32> -> vector<8x8xf32>
    %cst_42 = arith.constant 0.353553385 : f32
    %78 = vector.broadcast %cst_42 : f32 to vector<8x8xf32>
    %79 = arith.mulf %77, %78 : vector<8x8xf32>
    %80 = vector.broadcast %1 : vector<1x8xf32> to vector<8x8xf32>
    %81 = arith.addf %79, %80 : vector<8x8xf32>
    %cst_43 = arith.constant dense<0xFF800000> : vector<8xf32>
    %82 = vector.multi_reduction <maximumf>, %81, %cst_43 [1] : vector<8x8xf32> to vector<8xf32>
    %83 = vector.shape_cast %82 : vector<8xf32> to vector<8x1xf32>
    %84 = vector.broadcast %83 : vector<8x1xf32> to vector<8x8xf32>
    %85 = arith.subf %81, %84 : vector<8x8xf32>
    %86 = math.exp %85 : vector<8x8xf32>
    %cst_44 = arith.constant dense<0.000000e+00> : vector<8xf32>
    %87 = vector.multi_reduction <add>, %86, %cst_44 [1] : vector<8x8xf32> to vector<8xf32>
    %88 = vector.shape_cast %87 : vector<8xf32> to vector<8x1xf32>
    %89 = tpu.reciprocal %88 {approx = true} : vector<8x1xf32> -> vector<8x1xf32>
    %90 = vector.broadcast %89 : vector<8x1xf32> to vector<8x8xf32>
    %91 = arith.mulf %86, %90 : vector<8x8xf32>
    %92 = arith.truncf %91 : vector<8x8xf32> to vector<8x8xbf16>
    %cst_45 = arith.constant dense<0.000000e+00> : vector<8x8xf32>
    %93 = tpu.matmul %92, %76, %cst_45 {dimension_numbers = #tpu.dot_dimension_numbers<[1], [0], [0], [1], [0, 0, 1, 1], [], []>} : vector<8x8xbf16>, vector<8x8xbf16>, vector<8x8xf32> -> vector<8x8xf32>
    %94 = tpu.concatenate %24, %47, %70, %93 in 1 : vector<8x8xf32>, vector<8x8xf32>, vector<8x8xf32>, vector<8x8xf32> -> vector<8x32xf32>
    %95 = arith.truncf %94 : vector<8x32xf32> to vector<8x32xbf16>
    %c0_46 = arith.constant 0 : index
    %c0_47 = arith.constant 0 : index
    %c0_48 = arith.constant 0 : index
    %96 = vector.load %arg5[%c0_46, %c0_47, %c0_48] : memref<1x8x32xbf16, #tpu.memory_space<vmem>>, vector<1x8x32xbf16>
    %97 = vector.shape_cast %96 : vector<1x8x32xbf16> to vector<8x32xbf16>
    %98 = vector.shape_cast %95 : vector<8x32xbf16> to vector<1x8x32xbf16>
    tpu.vector_store %arg5[%c0_46, %c0_47, %c0_48], %98 {strides = array<i32>} : memref<1x8x32xbf16, #tpu.memory_space<vmem>>, vector<1x8x32xbf16>,
    return
  }
  func.func @transform_0(%arg0: i32, %arg1: i32) -> (i32, i32, i32) {
    %c0_i32 = arith.constant 0 : i32
    %c0_i32_0 = arith.constant 0 : i32
    return %arg0, %arg1, %c0_i32 : i32, i32, i32
  }
  func.func @transform_1(%arg0: i32, %arg1: i32) -> (i32, i32, i32) {
    %c0_i32 = arith.constant 0 : i32
    %c0_i32_0 = arith.constant 0 : i32
    %c0_i32_1 = arith.constant 0 : i32
    return %arg0, %c0_i32, %c0_i32_0 : i32, i32, i32
  }
  func.func @transform_2(%arg0: i32, %arg1: i32) -> (i32, i32, i32) {
    %c0_i32 = arith.constant 0 : i32
    %c0_i32_0 = arith.constant 0 : i32
    %c0_i32_1 = arith.constant 0 : i32
    return %arg0, %c0_i32, %c0_i32_0 : i32, i32, i32
  }
  func.func @transform_3(%arg0: i32, %arg1: i32) -> (i32, i32, i32) {
    %c0_i32 = arith.constant 0 : i32
    %c0_i32_0 = arith.constant 0 : i32
    return %arg0, %arg1, %c0_i32 : i32, i32, i32
  }
}

module attributes {stable_mosaic.version = 11 : i64} {
  func.func @_linear_kernel(%arg0: i32, %arg1: i32, %arg2: i32, %arg3: memref<16x32xbf16, #tpu.memory_space<vmem>>, %arg4: memref<32x32xbf16, #tpu.memory_space<vmem>>, %arg5: memref<1x32xf32, #tpu.memory_space<vmem>>, %arg6: memref<16x32xbf16, #tpu.memory_space<vmem>>, %arg7: memref<16x32xf32, #tpu.memory_space<vmem>>) attributes {dimension_semantics = [#tpu.dimension_semantics<parallel>, #tpu.dimension_semantics<parallel>, #tpu.dimension_semantics<arbitrary>], iteration_bounds = array<i64: 1, 1, 1>, scalar_prefetch = 0 : i64, scratch_operands = 1 : i64, tpu.core_type = #tpu.core_type<tc>, window_params = [{transform_indices = @transform_0, window_bounds = array<i64: 16, 32>}, {transform_indices = @transform_1, window_bounds = array<i64: 32, 32>}, {transform_indices = @transform_2, window_bounds = array<i64: 1, 32>}, {transform_indices = @transform_3, window_bounds = array<i64: 16, 32>}]} {
    %c0_i32 = arith.constant 0 : i32
    %0 = arith.cmpi eq, %arg2, %c0_i32 : i32
    %1 = arith.extui %0 : i1 to i32
    %c0_i32_0 = arith.constant 0 : i32
    %2 = arith.cmpi ne, %1, %c0_i32_0 : i32
    scf.if %2 {
      %cst_10 = arith.constant 0.000000e+00 : f32
      %12 = vector.broadcast %cst_10 : f32 to vector<16x32xf32>
      %c0_11 = arith.constant 0 : index
      %c0_12 = arith.constant 0 : index
      %13 = vector.load %arg7[%c0_11, %c0_12] : memref<16x32xf32, #tpu.memory_space<vmem>>, vector<16x32xf32>
      tpu.vector_store %arg7[%c0_11, %c0_12], %12 {strides = array<i32>} : memref<16x32xf32, #tpu.memory_space<vmem>>, vector<16x32xf32>,
    } else {
    }
    %c0 = arith.constant 0 : index
    %c0_1 = arith.constant 0 : index
    %3 = vector.load %arg7[%c0, %c0_1] : memref<16x32xf32, #tpu.memory_space<vmem>>, vector<16x32xf32>
    %c0_2 = arith.constant 0 : index
    %c0_3 = arith.constant 0 : index
    %4 = vector.load %arg3[%c0_2, %c0_3] : memref<16x32xbf16, #tpu.memory_space<vmem>>, vector<16x32xbf16>
    %c0_4 = arith.constant 0 : index
    %c0_5 = arith.constant 0 : index
    %5 = vector.load %arg4[%c0_4, %c0_5] : memref<32x32xbf16, #tpu.memory_space<vmem>>, vector<32x32xbf16>
    %cst = arith.constant dense<0.000000e+00> : vector<16x32xf32>
    %6 = tpu.matmul %4, %5, %cst {dimension_numbers = #tpu.dot_dimension_numbers<[1], [0], [0], [1], [0, 0, 1, 1], [], []>} : vector<16x32xbf16>, vector<32x32xbf16>, vector<16x32xf32> -> vector<16x32xf32>
    %7 = arith.addf %3, %6 : vector<16x32xf32>
    %c0_6 = arith.constant 0 : index
    %c0_7 = arith.constant 0 : index
    %8 = vector.load %arg7[%c0_6, %c0_7] : memref<16x32xf32, #tpu.memory_space<vmem>>, vector<16x32xf32>
    tpu.vector_store %arg7[%c0_6, %c0_7], %7 {strides = array<i32>} : memref<16x32xf32, #tpu.memory_space<vmem>>, vector<16x32xf32>,
    %c0_i32_8 = arith.constant 0 : i32
    %9 = arith.cmpi eq, %arg2, %c0_i32_8 : i32
    %10 = arith.extui %9 : i1 to i32
    %c0_i32_9 = arith.constant 0 : i32
    %11 = arith.cmpi ne, %10, %c0_i32_9 : i32
    scf.if %11 {
      %c0_10 = arith.constant 0 : index
      %c0_11 = arith.constant 0 : index
      %12 = vector.load %arg7[%c0_10, %c0_11] : memref<16x32xf32, #tpu.memory_space<vmem>>, vector<16x32xf32>
      %c0_12 = arith.constant 0 : index
      %c0_13 = arith.constant 0 : index
      %13 = vector.load %arg5[%c0_12, %c0_13] : memref<1x32xf32, #tpu.memory_space<vmem>>, vector<1x32xf32>
      %14 = vector.broadcast %13 : vector<1x32xf32> to vector<16x32xf32>
      %15 = arith.addf %12, %14 : vector<16x32xf32>
      %16 = arith.truncf %15 : vector<16x32xf32> to vector<16x32xbf16>
      %c0_14 = arith.constant 0 : index
      %c0_15 = arith.constant 0 : index
      %17 = vector.load %arg6[%c0_14, %c0_15] : memref<16x32xbf16, #tpu.memory_space<vmem>>, vector<16x32xbf16>
      tpu.vector_store %arg6[%c0_14, %c0_15], %16 {strides = array<i32>} : memref<16x32xbf16, #tpu.memory_space<vmem>>, vector<16x32xbf16>,
    } else {
    }
    return
  }
  func.func @transform_0(%arg0: i32, %arg1: i32, %arg2: i32) -> (i32, i32) {
    %c0_i32 = arith.constant 0 : i32
    return %arg0, %arg2 : i32, i32
  }
  func.func @transform_1(%arg0: i32, %arg1: i32, %arg2: i32) -> (i32, i32) {
    %c0_i32 = arith.constant 0 : i32
    return %arg2, %arg1 : i32, i32
  }
  func.func @transform_2(%arg0: i32, %arg1: i32, %arg2: i32) -> (i32, i32) {
    %c0_i32 = arith.constant 0 : i32
    %c0_i32_0 = arith.constant 0 : i32
    return %c0_i32, %arg1 : i32, i32
  }
  func.func @transform_3(%arg0: i32, %arg1: i32, %arg2: i32) -> (i32, i32) {
    %c0_i32 = arith.constant 0 : i32
    return %arg0, %arg1 : i32, i32
  }
}

module attributes {stable_mosaic.version = 11 : i64} {
  func.func @_linear_kernel(%arg0: i32, %arg1: i32, %arg2: i32, %arg3: memref<16x32xbf16, #tpu.memory_space<vmem>>, %arg4: memref<32x64xbf16, #tpu.memory_space<vmem>>, %arg5: memref<1x64xf32, #tpu.memory_space<vmem>>, %arg6: memref<16x64xbf16, #tpu.memory_space<vmem>>, %arg7: memref<16x64xf32, #tpu.memory_space<vmem>>) attributes {dimension_semantics = [#tpu.dimension_semantics<parallel>, #tpu.dimension_semantics<parallel>, #tpu.dimension_semantics<arbitrary>], iteration_bounds = array<i64: 1, 1, 1>, scalar_prefetch = 0 : i64, scratch_operands = 1 : i64, tpu.core_type = #tpu.core_type<tc>, window_params = [{transform_indices = @transform_0, window_bounds = array<i64: 16, 32>}, {transform_indices = @transform_1, window_bounds = array<i64: 32, 64>}, {transform_indices = @transform_2, window_bounds = array<i64: 1, 64>}, {transform_indices = @transform_3, window_bounds = array<i64: 16, 64>}]} {
    %c0_i32 = arith.constant 0 : i32
    %0 = arith.cmpi eq, %arg2, %c0_i32 : i32
    %1 = arith.extui %0 : i1 to i32
    %c0_i32_0 = arith.constant 0 : i32
    %2 = arith.cmpi ne, %1, %c0_i32_0 : i32
    scf.if %2 {
      %cst_10 = arith.constant 0.000000e+00 : f32
      %12 = vector.broadcast %cst_10 : f32 to vector<16x64xf32>
      %c0_11 = arith.constant 0 : index
      %c0_12 = arith.constant 0 : index
      %13 = vector.load %arg7[%c0_11, %c0_12] : memref<16x64xf32, #tpu.memory_space<vmem>>, vector<16x64xf32>
      tpu.vector_store %arg7[%c0_11, %c0_12], %12 {strides = array<i32>} : memref<16x64xf32, #tpu.memory_space<vmem>>, vector<16x64xf32>,
    } else {
    }
    %c0 = arith.constant 0 : index
    %c0_1 = arith.constant 0 : index
    %3 = vector.load %arg7[%c0, %c0_1] : memref<16x64xf32, #tpu.memory_space<vmem>>, vector<16x64xf32>
    %c0_2 = arith.constant 0 : index
    %c0_3 = arith.constant 0 : index
    %4 = vector.load %arg3[%c0_2, %c0_3] : memref<16x32xbf16, #tpu.memory_space<vmem>>, vector<16x32xbf16>
    %c0_4 = arith.constant 0 : index
    %c0_5 = arith.constant 0 : index
    %5 = vector.load %arg4[%c0_4, %c0_5] : memref<32x64xbf16, #tpu.memory_space<vmem>>, vector<32x64xbf16>
    %cst = arith.constant dense<0.000000e+00> : vector<16x64xf32>
    %6 = tpu.matmul %4, %5, %cst {dimension_numbers = #tpu.dot_dimension_numbers<[1], [0], [0], [1], [0, 0, 1, 1], [], []>} : vector<16x32xbf16>, vector<32x64xbf16>, vector<16x64xf32> -> vector<16x64xf32>
    %7 = arith.addf %3, %6 : vector<16x64xf32>
    %c0_6 = arith.constant 0 : index
    %c0_7 = arith.constant 0 : index
    %8 = vector.load %arg7[%c0_6, %c0_7] : memref<16x64xf32, #tpu.memory_space<vmem>>, vector<16x64xf32>
    tpu.vector_store %arg7[%c0_6, %c0_7], %7 {strides = array<i32>} : memref<16x64xf32, #tpu.memory_space<vmem>>, vector<16x64xf32>,
    %c0_i32_8 = arith.constant 0 : i32
    %9 = arith.cmpi eq, %arg2, %c0_i32_8 : i32
    %10 = arith.extui %9 : i1 to i32
    %c0_i32_9 = arith.constant 0 : i32
    %11 = arith.cmpi ne, %10, %c0_i32_9 : i32
    scf.if %11 {
      %c0_10 = arith.constant 0 : index
      %c0_11 = arith.constant 0 : index
      %12 = vector.load %arg7[%c0_10, %c0_11] : memref<16x64xf32, #tpu.memory_space<vmem>>, vector<16x64xf32>
      %c0_12 = arith.constant 0 : index
      %c0_13 = arith.constant 0 : index
      %13 = vector.load %arg5[%c0_12, %c0_13] : memref<1x64xf32, #tpu.memory_space<vmem>>, vector<1x64xf32>
      %14 = vector.broadcast %13 : vector<1x64xf32> to vector<16x64xf32>
      %15 = arith.addf %12, %14 : vector<16x64xf32>
      %16 = arith.mulf %15, %15 : vector<16x64xf32>
      %17 = arith.mulf %15, %16 : vector<16x64xf32>
      %cst_14 = arith.constant 4.471500e-02 : f32
      %18 = vector.broadcast %cst_14 : f32 to vector<16x64xf32>
      %19 = arith.mulf %18, %17 : vector<16x64xf32>
      %20 = arith.addf %15, %19 : vector<16x64xf32>
      %cst_15 = arith.constant 0.797884583 : f32
      %21 = vector.broadcast %cst_15 : f32 to vector<16x64xf32>
      %22 = arith.mulf %21, %20 : vector<16x64xf32>
      %23 = math.tanh %22 : vector<16x64xf32>
      %cst_16 = arith.constant 1.000000e+00 : f32
      %24 = vector.broadcast %cst_16 : f32 to vector<16x64xf32>
      %25 = arith.addf %24, %23 : vector<16x64xf32>
      %cst_17 = arith.constant 5.000000e-01 : f32
      %26 = vector.broadcast %cst_17 : f32 to vector<16x64xf32>
      %27 = arith.mulf %26, %25 : vector<16x64xf32>
      %28 = arith.mulf %15, %27 : vector<16x64xf32>
      %29 = arith.truncf %28 : vector<16x64xf32> to vector<16x64xbf16>
      %c0_18 = arith.constant 0 : index
      %c0_19 = arith.constant 0 : index
      %30 = vector.load %arg6[%c0_18, %c0_19] : memref<16x64xbf16, #tpu.memory_space<vmem>>, vector<16x64xbf16>
      tpu.vector_store %arg6[%c0_18, %c0_19], %29 {strides = array<i32>} : memref<16x64xbf16, #tpu.memory_space<vmem>>, vector<16x64xbf16>,
    } else {
    }
    return
  }
  func.func @transform_0(%arg0: i32, %arg1: i32, %arg2: i32) -> (i32, i32) {
    %c0_i32 = arith.constant 0 : i32
    return %arg0, %arg2 : i32, i32
  }
  func.func @transform_1(%arg0: i32, %arg1: i32, %arg2: i32) -> (i32, i32) {
    %c0_i32 = arith.constant 0 : i32
    return %arg2, %arg1 : i32, i32
  }
  func.func @transform_2(%arg0: i32, %arg1: i32, %arg2: i32) -> (i32, i32) {
    %c0_i32 = arith.constant 0 : i32
    %c0_i32_0 = arith.constant 0 : i32
    return %c0_i32, %arg1 : i32, i32
  }
  func.func @transform_3(%arg0: i32, %arg1: i32, %arg2: i32) -> (i32, i32) {
    %c0_i32 = arith.constant 0 : i32
    return %arg0, %arg1 : i32, i32
  }
}

module attributes {stable_mosaic.version = 11 : i64} {
  func.func @_add_layernorm_kernel(%arg0: i32, %arg1: memref<16x32xf32, #tpu.memory_space<vmem>>, %arg2: memref<16x32xbf16, #tpu.memory_space<vmem>>, %arg3: memref<1x32xf32, #tpu.memory_space<vmem>>, %arg4: memref<1x32xf32, #tpu.memory_space<vmem>>, %arg5: memref<16x32xf32, #tpu.memory_space<vmem>>) attributes {dimension_semantics = [#tpu.dimension_semantics<parallel>], iteration_bounds = array<i64: 1>, scalar_prefetch = 0 : i64, scratch_operands = 0 : i64, tpu.core_type = #tpu.core_type<tc>, window_params = [{transform_indices = @transform_0, window_bounds = array<i64: 16, 32>}, {transform_indices = @transform_1, window_bounds = array<i64: 16, 32>}, {pipeline_mode = #tpu.pipeline_mode<synchronous>, transform_indices = @transform_2, window_bounds = array<i64: 1, 32>}, {pipeline_mode = #tpu.pipeline_mode<synchronous>, transform_indices = @transform_3, window_bounds = array<i64: 1, 32>}, {transform_indices = @transform_4, window_bounds = array<i64: 16, 32>}]} {
    %c0 = arith.constant 0 : index
    %c0_0 = arith.constant 0 : index
    %0 = vector.load %arg1[%c0, %c0_0] : memref<16x32xf32, #tpu.memory_space<vmem>>, vector<16x32xf32>
    %c0_1 = arith.constant 0 : index
    %c0_2 = arith.constant 0 : index
    %1 = vector.load %arg2[%c0_1, %c0_2] : memref<16x32xbf16, #tpu.memory_space<vmem>>, vector<16x32xbf16>
    %2 = arith.extf %1 : vector<16x32xbf16> to vector<16x32xf32>
    %3 = arith.addf %0, %2 : vector<16x32xf32>
    %cst = arith.constant dense<0.000000e+00> : vector<16xf32>
    %4 = vector.multi_reduction <add>, %3, %cst [1] : vector<16x32xf32> to vector<16xf32>
    %5 = vector.shape_cast %4 : vector<16xf32> to vector<16x1xf32>
    %cst_3 = arith.constant 3.200000e+01 : f32
    %6 = vector.broadcast %cst_3 : f32 to vector<16x1xf32>
    %7 = arith.divf %5, %6 : vector<16x1xf32>
    %8 = vector.broadcast %7 : vector<16x1xf32> to vector<16x32xf32>
    %9 = arith.subf %3, %8 : vector<16x32xf32>
    %10 = arith.mulf %9, %9 : vector<16x32xf32>
    %cst_4 = arith.constant dense<0.000000e+00> : vector<16xf32>
    %11 = vector.multi_reduction <add>, %10, %cst_4 [1] : vector<16x32xf32> to vector<16xf32>
    %12 = vector.shape_cast %11 : vector<16xf32> to vector<16x1xf32>
    %cst_5 = arith.constant 3.200000e+01 : f32
    %13 = vector.broadcast %cst_5 : f32 to vector<16x1xf32>
    %14 = arith.divf %12, %13 : vector<16x1xf32>
    %15 = vector.broadcast %7 : vector<16x1xf32> to vector<16x32xf32>
    %16 = arith.subf %3, %15 : vector<16x32xf32>
    %cst_6 = arith.constant 9.99999996E-13 : f32
    %17 = vector.broadcast %cst_6 : f32 to vector<16x1xf32>
    %18 = arith.addf %14, %17 : vector<16x1xf32>
    %19 = math.rsqrt %18 : vector<16x1xf32>
    %20 = vector.broadcast %19 : vector<16x1xf32> to vector<16x32xf32>
    %21 = arith.mulf %16, %20 : vector<16x32xf32>
    %c0_7 = arith.constant 0 : index
    %c0_8 = arith.constant 0 : index
    %22 = vector.load %arg3[%c0_7, %c0_8] : memref<1x32xf32, #tpu.memory_space<vmem>>, vector<1x32xf32>
    %23 = vector.broadcast %22 : vector<1x32xf32> to vector<16x32xf32>
    %24 = arith.mulf %21, %23 : vector<16x32xf32>
    %c0_9 = arith.constant 0 : index
    %c0_10 = arith.constant 0 : index
    %25 = vector.load %arg4[%c0_9, %c0_10] : memref<1x32xf32, #tpu.memory_space<vmem>>, vector<1x32xf32>
    %26 = vector.broadcast %25 : vector<1x32xf32> to vector<16x32xf32>
    %27 = arith.addf %24, %26 : vector<16x32xf32>
    %c0_11 = arith.constant 0 : index
    %c0_12 = arith.constant 0 : index
    %28 = vector.load %arg5[%c0_11, %c0_12] : memref<16x32xf32, #tpu.memory_space<vmem>>, vector<16x32xf32>
    tpu.vector_store %arg5[%c0_11, %c0_12], %27 {strides = array<i32>} : memref<16x32xf32, #tpu.memory_space<vmem>>, vector<16x32xf32>,
    return
  }
  func.func @transform_0(%arg0: i32) -> (i32, i32) {
    %c0_i32 = arith.constant 0 : i32
    %c0_i32_0 = arith.constant 0 : i32
    return %arg0, %c0_i32 : i32, i32
  }
  func.func @transform_1(%arg0: i32) -> (i32, i32) {
    %c0_i32 = arith.constant 0 : i32
    %c0_i32_0 = arith.constant 0 : i32
    return %arg0, %c0_i32 : i32, i32
  }
  func.func @transform_2(%arg0: i32) -> (i32, i32) {
    %c0_i32 = arith.constant 0 : i32
    %c0_i32_0 = arith.constant 0 : i32
    %c0_i32_1 = arith.constant 0 : i32
    return %c0_i32, %c0_i32_0 : i32, i32
  }
  func.func @transform_3(%arg0: i32) -> (i32, i32) {
    %c0_i32 = arith.constant 0 : i32
    %c0_i32_0 = arith.constant 0 : i32
    %c0_i32_1 = arith.constant 0 : i32
    return %c0_i32, %c0_i32_0 : i32, i32
  }
  func.func @transform_4(%arg0: i32) -> (i32, i32) {
    %c0_i32 = arith.constant 0 : i32
    %c0_i32_0 = arith.constant 0 : i32
    return %arg0, %c0_i32 : i32, i32
  }
}

module attributes {stable_mosaic.version = 11 : i64} {
  func.func @_linear_kernel(%arg0: i32, %arg1: i32, %arg2: i32, %arg3: memref<16x64xbf16, #tpu.memory_space<vmem>>, %arg4: memref<64x32xbf16, #tpu.memory_space<vmem>>, %arg5: memref<1x32xf32, #tpu.memory_space<vmem>>, %arg6: memref<16x32xbf16, #tpu.memory_space<vmem>>, %arg7: memref<16x32xf32, #tpu.memory_space<vmem>>) attributes {dimension_semantics = [#tpu.dimension_semantics<parallel>, #tpu.dimension_semantics<parallel>, #tpu.dimension_semantics<arbitrary>], iteration_bounds = array<i64: 1, 1, 1>, scalar_prefetch = 0 : i64, scratch_operands = 1 : i64, tpu.core_type = #tpu.core_type<tc>, window_params = [{transform_indices = @transform_0, window_bounds = array<i64: 16, 64>}, {transform_indices = @transform_1, window_bounds = array<i64: 64, 32>}, {transform_indices = @transform_2, window_bounds = array<i64: 1, 32>}, {transform_indices = @transform_3, window_bounds = array<i64: 16, 32>}]} {
    %c0_i32 = arith.constant 0 : i32
    %0 = arith.cmpi eq, %arg2, %c0_i32 : i32
    %1 = arith.extui %0 : i1 to i32
    %c0_i32_0 = arith.constant 0 : i32
    %2 = arith.cmpi ne, %1, %c0_i32_0 : i32
    scf.if %2 {
      %cst_10 = arith.constant 0.000000e+00 : f32
      %12 = vector.broadcast %cst_10 : f32 to vector<16x32xf32>
      %c0_11 = arith.constant 0 : index
      %c0_12 = arith.constant 0 : index
      %13 = vector.load %arg7[%c0_11, %c0_12] : memref<16x32xf32, #tpu.memory_space<vmem>>, vector<16x32xf32>
      tpu.vector_store %arg7[%c0_11, %c0_12], %12 {strides = array<i32>} : memref<16x32xf32, #tpu.memory_space<vmem>>, vector<16x32xf32>,
    } else {
    }
    %c0 = arith.constant 0 : index
    %c0_1 = arith.constant 0 : index
    %3 = vector.load %arg7[%c0, %c0_1] : memref<16x32xf32, #tpu.memory_space<vmem>>, vector<16x32xf32>
    %c0_2 = arith.constant 0 : index
    %c0_3 = arith.constant 0 : index
    %4 = vector.load %arg3[%c0_2, %c0_3] : memref<16x64xbf16, #tpu.memory_space<vmem>>, vector<16x64xbf16>
    %c0_4 = arith.constant 0 : index
    %c0_5 = arith.constant 0 : index
    %5 = vector.load %arg4[%c0_4, %c0_5] : memref<64x32xbf16, #tpu.memory_space<vmem>>, vector<64x32xbf16>
    %cst = arith.constant dense<0.000000e+00> : vector<16x32xf32>
    %6 = tpu.matmul %4, %5, %cst {dimension_numbers = #tpu.dot_dimension_numbers<[1], [0], [0], [1], [0, 0, 1, 1], [], []>} : vector<16x64xbf16>, vector<64x32xbf16>, vector<16x32xf32> -> vector<16x32xf32>
    %7 = arith.addf %3, %6 : vector<16x32xf32>
    %c0_6 = arith.constant 0 : index
    %c0_7 = arith.constant 0 : index
    %8 = vector.load %arg7[%c0_6, %c0_7] : memref<16x32xf32, #tpu.memory_space<vmem>>, vector<16x32xf32>
    tpu.vector_store %arg7[%c0_6, %c0_7], %7 {strides = array<i32>} : memref<16x32xf32, #tpu.memory_space<vmem>>, vector<16x32xf32>,
    %c0_i32_8 = arith.constant 0 : i32
    %9 = arith.cmpi eq, %arg2, %c0_i32_8 : i32
    %10 = arith.extui %9 : i1 to i32
    %c0_i32_9 = arith.constant 0 : i32
    %11 = arith.cmpi ne, %10, %c0_i32_9 : i32
    scf.if %11 {
      %c0_10 = arith.constant 0 : index
      %c0_11 = arith.constant 0 : index
      %12 = vector.load %arg7[%c0_10, %c0_11] : memref<16x32xf32, #tpu.memory_space<vmem>>, vector<16x32xf32>
      %c0_12 = arith.constant 0 : index
      %c0_13 = arith.constant 0 : index
      %13 = vector.load %arg5[%c0_12, %c0_13] : memref<1x32xf32, #tpu.memory_space<vmem>>, vector<1x32xf32>
      %14 = vector.broadcast %13 : vector<1x32xf32> to vector<16x32xf32>
      %15 = arith.addf %12, %14 : vector<16x32xf32>
      %16 = arith.truncf %15 : vector<16x32xf32> to vector<16x32xbf16>
      %c0_14 = arith.constant 0 : index
      %c0_15 = arith.constant 0 : index
      %17 = vector.load %arg6[%c0_14, %c0_15] : memref<16x32xbf16, #tpu.memory_space<vmem>>, vector<16x32xbf16>
      tpu.vector_store %arg6[%c0_14, %c0_15], %16 {strides = array<i32>} : memref<16x32xbf16, #tpu.memory_space<vmem>>, vector<16x32xbf16>,
    } else {
    }
    return
  }
  func.func @transform_0(%arg0: i32, %arg1: i32, %arg2: i32) -> (i32, i32) {
    %c0_i32 = arith.constant 0 : i32
    return %arg0, %arg2 : i32, i32
  }
  func.func @transform_1(%arg0: i32, %arg1: i32, %arg2: i32) -> (i32, i32) {
    %c0_i32 = arith.constant 0 : i32
    return %arg2, %arg1 : i32, i32
  }
  func.func @transform_2(%arg0: i32, %arg1: i32, %arg2: i32) -> (i32, i32) {
    %c0_i32 = arith.constant 0 : i32
    %c0_i32_0 = arith.constant 0 : i32
    return %c0_i32, %arg1 : i32, i32
  }
  func.func @transform_3(%arg0: i32, %arg1: i32, %arg2: i32) -> (i32, i32) {
    %c0_i32 = arith.constant 0 : i32
    return %arg0, %arg1 : i32, i32
  }
}

module attributes {stable_mosaic.version = 11 : i64} {
  func.func @_linear_kernel(%arg0: i32, %arg1: i32, %arg2: i32, %arg3: memref<16x32xbf16, #tpu.memory_space<vmem>>, %arg4: memref<32x5xbf16, #tpu.memory_space<vmem>>, %arg5: memref<1x5xf32, #tpu.memory_space<vmem>>, %arg6: memref<16x5xf32, #tpu.memory_space<vmem>>, %arg7: memref<16x5xf32, #tpu.memory_space<vmem>>) attributes {dimension_semantics = [#tpu.dimension_semantics<parallel>, #tpu.dimension_semantics<parallel>, #tpu.dimension_semantics<arbitrary>], iteration_bounds = array<i64: 1, 1, 1>, scalar_prefetch = 0 : i64, scratch_operands = 1 : i64, tpu.core_type = #tpu.core_type<tc>, window_params = [{transform_indices = @transform_0, window_bounds = array<i64: 16, 32>}, {transform_indices = @transform_1, window_bounds = array<i64: 32, 5>}, {transform_indices = @transform_2, window_bounds = array<i64: 1, 5>}, {transform_indices = @transform_3, window_bounds = array<i64: 16, 5>}]} {
    %c0_i32 = arith.constant 0 : i32
    %0 = arith.cmpi eq, %arg2, %c0_i32 : i32
    %1 = arith.extui %0 : i1 to i32
    %c0_i32_0 = arith.constant 0 : i32
    %2 = arith.cmpi ne, %1, %c0_i32_0 : i32
    scf.if %2 {
      %cst_10 = arith.constant 0.000000e+00 : f32
      %12 = vector.broadcast %cst_10 : f32 to vector<16x5xf32>
      %c0_11 = arith.constant 0 : index
      %c0_12 = arith.constant 0 : index
      %13 = vector.load %arg7[%c0_11, %c0_12] : memref<16x5xf32, #tpu.memory_space<vmem>>, vector<16x5xf32>
      tpu.vector_store %arg7[%c0_11, %c0_12], %12 {strides = array<i32>} : memref<16x5xf32, #tpu.memory_space<vmem>>, vector<16x5xf32>,
    } else {
    }
    %c0 = arith.constant 0 : index
    %c0_1 = arith.constant 0 : index
    %3 = vector.load %arg7[%c0, %c0_1] : memref<16x5xf32, #tpu.memory_space<vmem>>, vector<16x5xf32>
    %c0_2 = arith.constant 0 : index
    %c0_3 = arith.constant 0 : index
    %4 = vector.load %arg3[%c0_2, %c0_3] : memref<16x32xbf16, #tpu.memory_space<vmem>>, vector<16x32xbf16>
    %c0_4 = arith.constant 0 : index
    %c0_5 = arith.constant 0 : index
    %5 = vector.load %arg4[%c0_4, %c0_5] : memref<32x5xbf16, #tpu.memory_space<vmem>>, vector<32x5xbf16>
    %cst = arith.constant dense<0.000000e+00> : vector<16x5xf32>
    %6 = tpu.matmul %4, %5, %cst {dimension_numbers = #tpu.dot_dimension_numbers<[1], [0], [0], [1], [0, 0, 1, 1], [], []>} : vector<16x32xbf16>, vector<32x5xbf16>, vector<16x5xf32> -> vector<16x5xf32>
    %7 = arith.addf %3, %6 : vector<16x5xf32>
    %c0_6 = arith.constant 0 : index
    %c0_7 = arith.constant 0 : index
    %8 = vector.load %arg7[%c0_6, %c0_7] : memref<16x5xf32, #tpu.memory_space<vmem>>, vector<16x5xf32>
    tpu.vector_store %arg7[%c0_6, %c0_7], %7 {strides = array<i32>} : memref<16x5xf32, #tpu.memory_space<vmem>>, vector<16x5xf32>,
    %c0_i32_8 = arith.constant 0 : i32
    %9 = arith.cmpi eq, %arg2, %c0_i32_8 : i32
    %10 = arith.extui %9 : i1 to i32
    %c0_i32_9 = arith.constant 0 : i32
    %11 = arith.cmpi ne, %10, %c0_i32_9 : i32
    scf.if %11 {
      %c0_10 = arith.constant 0 : index
      %c0_11 = arith.constant 0 : index
      %12 = vector.load %arg7[%c0_10, %c0_11] : memref<16x5xf32, #tpu.memory_space<vmem>>, vector<16x5xf32>
      %c0_12 = arith.constant 0 : index
      %c0_13 = arith.constant 0 : index
      %13 = vector.load %arg5[%c0_12, %c0_13] : memref<1x5xf32, #tpu.memory_space<vmem>>, vector<1x5xf32>
      %14 = vector.broadcast %13 : vector<1x5xf32> to vector<16x5xf32>
      %15 = arith.addf %12, %14 : vector<16x5xf32>
      %c0_14 = arith.constant 0 : index
      %c0_15 = arith.constant 0 : index
      %16 = vector.load %arg6[%c0_14, %c0_15] : memref<16x5xf32, #tpu.memory_space<vmem>>, vector<16x5xf32>
      tpu.vector_store %arg6[%c0_14, %c0_15], %15 {strides = array<i32>} : memref<16x5xf32, #tpu.memory_space<vmem>>, vector<16x5xf32>,
    } else {
    }
    return
  }
  func.func @transform_0(%arg0: i32, %arg1: i32, %arg2: i32) -> (i32, i32) {
    %c0_i32 = arith.constant 0 : i32
    return %arg0, %arg2 : i32, i32
  }
  func.func @transform_1(%arg0: i32, %arg1: i32, %arg2: i32) -> (i32, i32) {
    %c0_i32 = arith.constant 0 : i32
    return %arg2, %arg1 : i32, i32
  }
  func.func @transform_2(%arg0: i32, %arg1: i32, %arg2: i32) -> (i32, i32) {
    %c0_i32 = arith.constant 0 : i32
    %c0_i32_0 = arith.constant 0 : i32
    return %c0_i32, %arg1 : i32, i32
  }
  func.func @transform_3(%arg0: i32, %arg1: i32, %arg2: i32) -> (i32, i32) {
    %c0_i32 = arith.constant 0 : i32
    return %arg0, %arg1 : i32, i32
  }
}

</mosaic_0001>

<llo_original>
// kernel: _lambda_.17
$region0: #{_lambda_.17}
  #allocation0 [shape = 'u32[]', space=smem, size = 0x4, offset = 0x4, fixed_abs, tag = 'smem constant byte address 0x4 - core index']
  #allocation1 [shape = 'u32[144,128]{1,0:T(1,128)}', space=vmem, size = 0x12000, scoped, tag = 'internal scratch']
  #allocation2 [shape = 'f32[16,96]{1,0:T(8,128)}', space=vmem, size = 0x2000, scoped, tag = 'scratch operand']
  %s0 = inlined_call_operand.vmem [shape: bf16[16,32], index: 0, kind: input, shape index: {}]
  %s1 = inlined_call_operand.vmem [shape: bf16[32,96], index: 1, kind: input, shape index: {}]
  %s2 = inlined_call_operand.vmem [shape: f32[1,96], index: 2, kind: input, shape index: {}]
  %s3 = inlined_call_operand.vmem [shape: bf16[16,96], index: 3, kind: output, shape index: {}]
  %s4 = sld [smem:[#allocation0]]
  $region30: #{_lambda_.17} parent=0
    _
  %s6 = ssub.s32 1, %s4
  %s7 = scalar_select 0, %s6, %s4
  // Predicated region
  $region2: #{_lambda_.17} parent=0 // pred_check
    _
  $region3: #{_lambda_.17} parent=0 // pred_check_branch
    %9 = sbr.rel (0) target = $region5
  $region4: #{_lambda_.17} parent=0 // pred_region
    _
  $region5: #{_lambda_.17} parent=0 // pred_fallthru
    _
  // Predicated region
  $region6: #{_lambda_.17} parent=0 // pred_check
    _
  $region7: #{_lambda_.17} parent=0 // pred_check_branch
    %11 = sbr.rel (0) target = $region9
  $region8: #{_lambda_.17} parent=0 // pred_region
    _
  $region9: #{_lambda_.17} parent=0 // pred_fallthru
    _
  // Predicated region
  $region10: #{_lambda_.17} parent=0 // pred_check
    _
  $region11: #{_lambda_.17} parent=0 // pred_check_branch
    %13 = sbr.rel (0) target = $region13
  $region12: #{_lambda_.17} parent=0 // pred_region
    _
  $region13: #{_lambda_.17} parent=0 // pred_fallthru
    _
  %p15 = scmp.eq.s32.totalorder 0, 0
  // Predicated region
  $region14: #{_lambda_.17} parent=0 // pred_check
    %p16 = pneg %p15
  $region15: #{_lambda_.17} parent=0 // pred_check_branch
    %18 = sbr.rel (%p16) target = $region17
  $region16: #{_lambda_.17} parent=0 // pred_region
    %vm19 = vcmask 785408
    %20 = vst.msk [vmem:[#allocation2] sm:$0xff] %vm19, 0.0
    %21 = vst.msk [vmem:[#allocation2 + $0x8] sm:$0xff] %vm19, 0.0
  $region17: #{_lambda_.17} parent=0 // pred_fallthru
    _
  %v22 = vld [vmem:[#allocation2] sm:$0xff]
  %v23 = vld [vmem:[#allocation2 + $0x8] sm:$0xff]
  %v24 = vld [vmem:[%s0] sm:$0xf]
  %v25 = vld [vmem:[%s0 + $0x4] sm:$0xf]
  %v26 = vld [vmem:[%s1] sm:$0xf]
  %v27 = vld [vmem:[%s1 + $0x4] sm:$0xf]
  %v28 = vld [vmem:[%s1 + $0x8] sm:$0xf]
  %v29 = vld [vmem:[%s1 + $0xc] sm:$0xf]
  %v32 = vunpack.c.l.b16 %v24
  %v33 = vunpack.c.l.b16 %v25
  %v34 = vpack.c.b16 %v33, %v32
  %v39 = vunpack.c.l.b16 %v26
  %v40 = vunpack.c.l.b16 %v27
  %v41 = vunpack.c.l.b16 %v28
  %v42 = vunpack.c.l.b16 %v29
  %v43 = vpack.c.b16 %v40, %v39
  %v44 = vpack.c.b16 %v42, %v41
  %vm47 = vcmask 261120
  %v49 = vsel %vm47, %v34, 0
  %51 = vmatprep.subr.bf16.mxu0 0
  %52 = vmatpush1.bf16.msra.mxu0 %v43
  %53 = vmatprep.subr.bf16.mxu0 0
  %54 = vmatpush1.bf16.msra.mxu0 %v44
  %55 = vmatprep.subr.bf16.mxu0 0
  %56 = vmatpush1.bf16.msra.mxu0 0
  %57 = vmatprep.subr.bf16.mxu0 0
  %58 = vmatpush1.bf16.msra.mxu0 0
  %59 = vmatprep.subr.bf16.mxu0 0
  %60 = vmatpush1.bf16.msra.mxu0 0
  %61 = vmatprep.subr.bf16.mxu0 0
  %62 = vmatpush1.bf16.msra.mxu0 0
  %63 = vmatprep.subr.bf16.mxu0 0
  %64 = vmatpush1.bf16.msra.mxu0 0
  %65 = vmatprep.subr.bf16.mxu0 0
  %66 = vmatpush1.bf16.msra.mxu0 0
  %67 = vmatprep.subr.bf16.mxu0 0
  %68 = vmatpush1.bf16.msra.mxu0 0
  %69 = vmatprep.subr.bf16.mxu0 0
  %70 = vmatpush1.bf16.msra.mxu0 0
  %71 = vmatprep.subr.bf16.mxu0 0
  %72 = vmatpush1.bf16.msra.mxu0 0
  %73 = vmatprep.subr.bf16.mxu0 0
  %74 = vmatpush1.bf16.msra.mxu0 0
  %75 = vmatprep.subr.bf16.mxu0 0
  %76 = vmatpush1.bf16.msra.mxu0 0
  %77 = vmatprep.subr.bf16.mxu0 0
  %78 = vmatpush1.bf16.msra.mxu0 0
  %79 = vmatprep.subr.bf16.mxu0 0
  %80 = vmatpush1.bf16.msra.mxu0 0
  %81 = vmatprep.subr.bf16.mxu0 0
  %82 = vmatpush1.bf16.msra.mxu0 0
  %83 = vmatprep.mubr.bf16.mxu0 0
  %84 = vmatmul.mubr.bf16.gmra.mrb[0].mxu0 %v49
  %v85 = vpop.f32.mrb[0].mxu0
  %v86 = vadd.f32 0.0, %v85
  %v87 = vpop.f32.mrb[0].mxu0
  %v88 = vpop.f32.mrb[0].mxu0
  %v89 = vadd.f32 0.0, %v88
  %v90 = vpop.f32.mrb[0].mxu0
  %91 = vdwg.mxu0
  %v92 = vadd.f32 %v22, %v86
  %v93 = vadd.f32 %v23, %v89
  %vm94 = vcmask 785408
  %95 = vst.msk [vmem:[#allocation2] sm:$0xff] %vm94, %v92
  %96 = vst.msk [vmem:[#allocation2 + $0x8] sm:$0xff] %vm94, %v93
  // Predicated region
  $region18: #{_lambda_.17} parent=0 // pred_check
    %p97 = pneg %p15
  $region19: #{_lambda_.17} parent=0 // pred_check_branch
    %99 = sbr.rel (%p97) target = $region21
  $region20: #{_lambda_.17} parent=0 // pred_region
    %v100 = vld [vmem:[#allocation2] sm:$0xff]
    %v101 = vld [vmem:[#allocation2 + $0x8] sm:$0xff]
    %v102 = vld [vmem:[%s2] sm:$0x1]
    %v104 = vlaneseq
    %v105 = vshrl.u32 %v104, 7
    %v106 = vsub.s32 0, %v105
    %v107 = vrot.slane %v102, %v106
    %v109 = vadd.f32 %v100, %v107
    %v110 = vadd.f32 %v101, %v107
    %v111 = vpack.c.bf16 %v110, %v109
    %v113 = vunpack.c.l.b16 %v111
    %v114 = vunpack.c.h.b16 %v111
    %v115 = vpack.c.b16 %v113, %v113
    %v116 = vpack.c.b16 %v114, %v114
    %vm119 = vcmask 781312
    %120 = vst.msk [vmem:[%s3] sm:$0xf] %vm119, %v115
    %121 = vst.msk [vmem:[%s3 + $0x4] sm:$0xf] %vm119, %v116
  $region21: #{_lambda_.17} parent=0 // pred_fallthru
    _
  // Predicated region
  $region22: #{_lambda_.17} parent=0 // pred_check
    _
  $region23: #{_lambda_.17} parent=0 // pred_check_branch
    %123 = sbr.rel (0) target = $region25
  $region24: #{_lambda_.17} parent=0 // pred_region
    _
  $region25: #{_lambda_.17} parent=0 // pred_fallthru
    _
  // Predicated region
  $region26: #{_lambda_.17} parent=0 // pred_check
    _
  $region27: #{_lambda_.17} parent=0 // pred_check_branch
    %125 = sbr.rel (0) target = $region29
  $region28: #{_lambda_.17} parent=0 // pred_region
    _
  $region29: #{_lambda_.17} parent=0 // pred_fallthru
    _

// kernel: _lambda_.19
$region0: #{_lambda_.19}
  #allocation0 [shape = 'u32[]', space=smem, size = 0x4, offset = 0x4, fixed_abs, tag = 'smem constant byte address 0x4 - core index']
  #allocation1 [shape = 'u32[144,128]{1,0:T(1,128)}', space=vmem, size = 0x12000, scoped, tag = 'internal scratch']
  #allocation2 [shape = 'f32[16,32]{1,0:T(8,128)}', space=vmem, size = 0x2000, scoped, tag = 'scratch operand']
  %s0 = inlined_call_operand.vmem [shape: bf16[16,32], index: 0, kind: input, shape index: {}]
  %s1 = inlined_call_operand.vmem [shape: bf16[32,32], index: 1, kind: input, shape index: {}]
  %s2 = inlined_call_operand.vmem [shape: f32[1,32], index: 2, kind: input, shape index: {}]
  %s3 = inlined_call_operand.vmem [shape: bf16[16,32], index: 3, kind: output, shape index: {}]
  %s4 = sld [smem:[#allocation0]]
  $region30: #{_lambda_.19} parent=0
    _
  %s6 = ssub.s32 1, %s4
  %s7 = scalar_select 0, %s6, %s4
  // Predicated region
  $region2: #{_lambda_.19} parent=0 // pred_check
    _
  $region3: #{_lambda_.19} parent=0 // pred_check_branch
    %9 = sbr.rel (0) target = $region5
  $region4: #{_lambda_.19} parent=0 // pred_region
    _
  $region5: #{_lambda_.19} parent=0 // pred_fallthru
    _
  // Predicated region
  $region6: #{_lambda_.19} parent=0 // pred_check
    _
  $region7: #{_lambda_.19} parent=0 // pred_check_branch
    %11 = sbr.rel (0) target = $region9
  $region8: #{_lambda_.19} parent=0 // pred_region
    _
  $region9: #{_lambda_.19} parent=0 // pred_fallthru
    _
  // Predicated region
  $region10: #{_lambda_.19} parent=0 // pred_check
    _
  $region11: #{_lambda_.19} parent=0 // pred_check_branch
    %13 = sbr.rel (0) target = $region13
  $region12: #{_lambda_.19} parent=0 // pred_region
    _
  $region13: #{_lambda_.19} parent=0 // pred_fallthru
    _
  %p15 = scmp.eq.s32.totalorder 0, 0
  // Predicated region
  $region14: #{_lambda_.19} parent=0 // pred_check
    %p16 = pneg %p15
  $region15: #{_lambda_.19} parent=0 // pred_check_branch
    %18 = sbr.rel (%p16) target = $region17
  $region16: #{_lambda_.19} parent=0 // pred_region
    %vm19 = vcmask 261120
    %20 = vst.msk [vmem:[#allocation2] sm:$0xff] %vm19, 0.0
    %21 = vst.msk [vmem:[#allocation2 + $0x8] sm:$0xff] %vm19, 0.0
  $region17: #{_lambda_.19} parent=0 // pred_fallthru
    _
  %v22 = vld [vmem:[#allocation2] sm:$0xff]
  %v23 = vld [vmem:[#allocation2 + $0x8] sm:$0xff]
  %v24 = vld [vmem:[%s0] sm:$0xf]
  %v25 = vld [vmem:[%s0 + $0x4] sm:$0xf]
  %v26 = vld [vmem:[%s1] sm:$0xf]
  %v27 = vld [vmem:[%s1 + $0x4] sm:$0xf]
  %v28 = vld [vmem:[%s1 + $0x8] sm:$0xf]
  %v29 = vld [vmem:[%s1 + $0xc] sm:$0xf]
  %v32 = vunpack.c.l.b16 %v24
  %v33 = vunpack.c.l.b16 %v25
  %v34 = vpack.c.b16 %v33, %v32
  %v39 = vunpack.c.l.b16 %v26
  %v40 = vunpack.c.l.b16 %v27
  %v41 = vunpack.c.l.b16 %v28
  %v42 = vunpack.c.l.b16 %v29
  %v43 = vpack.c.b16 %v40, %v39
  %v44 = vpack.c.b16 %v42, %v41
  %vm47 = vcmask 261120
  %v49 = vsel %vm47, %v34, 0
  %51 = vmatprep.subr.bf16.mxu0 0
  %52 = vmatpush1.bf16.msra.mxu0 %v43
  %53 = vmatprep.subr.bf16.mxu0 0
  %54 = vmatpush1.bf16.msra.mxu0 %v44
  %55 = vmatprep.subr.bf16.mxu0 0
  %56 = vmatpush1.bf16.msra.mxu0 0
  %57 = vmatprep.subr.bf16.mxu0 0
  %58 = vmatpush1.bf16.msra.mxu0 0
  %59 = vmatprep.subr.bf16.mxu0 0
  %60 = vmatpush1.bf16.msra.mxu0 0
  %61 = vmatprep.subr.bf16.mxu0 0
  %62 = vmatpush1.bf16.msra.mxu0 0
  %63 = vmatprep.subr.bf16.mxu0 0
  %64 = vmatpush1.bf16.msra.mxu0 0
  %65 = vmatprep.subr.bf16.mxu0 0
  %66 = vmatpush1.bf16.msra.mxu0 0
  %67 = vmatprep.subr.bf16.mxu0 0
  %68 = vmatpush1.bf16.msra.mxu0 0
  %69 = vmatprep.subr.bf16.mxu0 0
  %70 = vmatpush1.bf16.msra.mxu0 0
  %71 = vmatprep.subr.bf16.mxu0 0
  %72 = vmatpush1.bf16.msra.mxu0 0
  %73 = vmatprep.subr.bf16.mxu0 0
  %74 = vmatpush1.bf16.msra.mxu0 0
  %75 = vmatprep.subr.bf16.mxu0 0
  %76 = vmatpush1.bf16.msra.mxu0 0
  %77 = vmatprep.subr.bf16.mxu0 0
  %78 = vmatpush1.bf16.msra.mxu0 0
  %79 = vmatprep.subr.bf16.mxu0 0
  %80 = vmatpush1.bf16.msra.mxu0 0
  %81 = vmatprep.subr.bf16.mxu0 0
  %82 = vmatpush1.bf16.msra.mxu0 0
  %83 = vmatprep.mubr.bf16.mxu0 0
  %84 = vmatmul.mubr.bf16.gmra.mrb[0].mxu0 %v49
  %v85 = vpop.f32.mrb[0].mxu0
  %v86 = vadd.f32 0.0, %v85
  %v87 = vpop.f32.mrb[0].mxu0
  %v88 = vpop.f32.mrb[0].mxu0
  %v89 = vadd.f32 0.0, %v88
  %v90 = vpop.f32.mrb[0].mxu0
  %91 = vdwg.mxu0
  %v92 = vadd.f32 %v22, %v86
  %v93 = vadd.f32 %v23, %v89
  %94 = vst.msk [vmem:[#allocation2] sm:$0xff] %vm47, %v92
  %95 = vst.msk [vmem:[#allocation2 + $0x8] sm:$0xff] %vm47, %v93
  // Predicated region
  $region18: #{_lambda_.19} parent=0 // pred_check
    %p96 = pneg %p15
  $region19: #{_lambda_.19} parent=0 // pred_check_branch
    %98 = sbr.rel (%p96) target = $region21
  $region20: #{_lambda_.19} parent=0 // pred_region
    %v99 = vld [vmem:[#allocation2] sm:$0xff]
    %v100 = vld [vmem:[#allocation2 + $0x8] sm:$0xff]
    %v101 = vld [vmem:[%s2] sm:$0x1]
    %v103 = vlaneseq
    %v104 = vshrl.u32 %v103, 7
    %v105 = vsub.s32 0, %v104
    %v106 = vrot.slane %v101, %v105
    %v108 = vadd.f32 %v99, %v106
    %v109 = vadd.f32 %v100, %v106
    %v110 = vpack.c.bf16 %v109, %v108
    %v112 = vunpack.c.l.b16 %v110
    %v113 = vunpack.c.h.b16 %v110
    %v114 = vpack.c.b16 %v112, %v112
    %v115 = vpack.c.b16 %v113, %v113
    %vm118 = vcmask 257024
    %119 = vst.msk [vmem:[%s3] sm:$0xf] %vm118, %v114
    %120 = vst.msk [vmem:[%s3 + $0x4] sm:$0xf] %vm118, %v115
  $region21: #{_lambda_.19} parent=0 // pred_fallthru
    _
  // Predicated region
  $region22: #{_lambda_.19} parent=0 // pred_check
    _
  $region23: #{_lambda_.19} parent=0 // pred_check_branch
    %122 = sbr.rel (0) target = $region25
  $region24: #{_lambda_.19} parent=0 // pred_region
    _
  $region25: #{_lambda_.19} parent=0 // pred_fallthru
    _
  // Predicated region
  $region26: #{_lambda_.19} parent=0 // pred_check
    _
  $region27: #{_lambda_.19} parent=0 // pred_check_branch
    %124 = sbr.rel (0) target = $region29
  $region28: #{_lambda_.19} parent=0 // pred_region
    _
  $region29: #{_lambda_.19} parent=0 // pred_fallthru
    _

// kernel: _lambda_.16
$region0: #{_lambda_.16}
  #allocation0 [shape = 'u32[]', space=smem, size = 0x4, offset = 0x4, fixed_abs, tag = 'smem constant byte address 0x4 - core index']
  #allocation1 [shape = 'u32[144,128]{1,0:T(1,128)}', space=vmem, size = 0x12000, scoped, tag = 'internal scratch']
  %s0 = inlined_call_operand.vmem [shape: f32[16,32], index: 0, kind: input, shape index: {}]
  %s1 = inlined_call_operand.vmem [shape: f32[1,32], index: 1, kind: input, shape index: {}]
  %s2 = inlined_call_operand.vmem [shape: f32[1,32], index: 2, kind: input, shape index: {}]
  %s3 = inlined_call_operand.vmem [shape: f32[16,32], index: 3, kind: output, shape index: {}]
  %s4 = sld [smem:[#allocation0]]
  $region22: #{_lambda_.16} parent=0
    _
  %s6 = ssub.s32 1, %s4
  %s7 = scalar_select 0, %s6, %s4
  // Predicated region
  $region2: #{_lambda_.16} parent=0 // pred_check
    _
  $region3: #{_lambda_.16} parent=0 // pred_check_branch
    %9 = sbr.rel (0) target = $region5
  $region4: #{_lambda_.16} parent=0 // pred_region
    _
  $region5: #{_lambda_.16} parent=0 // pred_fallthru
    _
  // Predicated region
  $region6: #{_lambda_.16} parent=0 // pred_check
    _
  $region7: #{_lambda_.16} parent=0 // pred_check_branch
    %11 = sbr.rel (0) target = $region9
  $region8: #{_lambda_.16} parent=0 // pred_region
    _
  $region9: #{_lambda_.16} parent=0 // pred_fallthru
    _
  // Predicated region
  $region10: #{_lambda_.16} parent=0 // pred_check
    _
  $region11: #{_lambda_.16} parent=0 // pred_check_branch
    %13 = sbr.rel (0) target = $region13
  $region12: #{_lambda_.16} parent=0 // pred_region
    _
  $region13: #{_lambda_.16} parent=0 // pred_fallthru
    _
  %v14 = vld [vmem:[%s0] sm:$0xff]
  %v15 = vld [vmem:[%s0 + $0x8] sm:$0xff]
  %vm16 = vcmask 261120
  %v17 = vsel %vm16, %v14, 0.0
  %18 = vadd.xlane.f32.xlu0 %v17
  %v19 = vpop.xlane.xlu0 %18
  %v20 = vsel %vm16, %v15, 0.0
  %21 = vadd.xlane.f32.xlu0 %v20
  %v22 = vpop.xlane.xlu0 %21
  %v23 = vrcp.pop 32.0
  %v24 = vmul.f32 %v19, %v23
  %v25 = vmul.f32 %v22, %v23
  %v26 = vsub.f32 %v14, %v24
  %v27 = vsub.f32 %v15, %v25
  %v28 = vmul.f32 %v26, %v26
  %v29 = vmul.f32 %v27, %v27
  %v30 = vsel %vm16, %v28, 0.0
  %31 = vadd.xlane.f32.xlu0 %v30
  %v32 = vpop.xlane.xlu0 %31
  %v33 = vsel %vm16, %v29, 0.0
  %34 = vadd.xlane.f32.xlu0 %v33
  %v35 = vpop.xlane.xlu0 %34
  %v36 = vmul.f32 %v32, %v23
  %v37 = vmul.f32 %v35, %v23
  %v38 = vadd.f32 %v36, 1e-12
  %v39 = vadd.f32 %v37, 1e-12
  %v40 = vrsqrt.pop %v38
  %v41 = vrsqrt.pop %v39
  %v42 = vmul.f32 %v26, %v40
  %v43 = vmul.f32 %v27, %v41
  %v44 = vld [vmem:[%s1] sm:$0x1]
  %v46 = vlaneseq
  %v47 = vshrl.u32 %v46, 7
  %v48 = vsub.s32 0, %v47
  %v49 = vrot.slane %v44, %v48
  %v51 = vmul.f32 %v42, %v49
  %v52 = vmul.f32 %v43, %v49
  %v53 = vld [vmem:[%s2] sm:$0x1]
  %v55 = vlaneseq
  %v56 = vshrl.u32 %v55, 7
  %v57 = vsub.s32 0, %v56
  %v58 = vrot.slane %v53, %v57
  %v60 = vadd.f32 %v51, %v58
  %v61 = vadd.f32 %v52, %v58
  %62 = vst.msk [vmem:[%s3] sm:$0xff] %vm16, %v60
  %63 = vst.msk [vmem:[%s3 + $0x8] sm:$0xff] %vm16, %v61
  // Predicated region
  $region14: #{_lambda_.16} parent=0 // pred_check
    _
  $region15: #{_lambda_.16} parent=0 // pred_check_branch
    %65 = sbr.rel (0) target = $region17
  $region16: #{_lambda_.16} parent=0 // pred_region
    _
  $region17: #{_lambda_.16} parent=0 // pred_fallthru
    _
  // Predicated region
  $region18: #{_lambda_.16} parent=0 // pred_check
    _
  $region19: #{_lambda_.16} parent=0 // pred_check_branch
    %67 = sbr.rel (0) target = $region21
  $region20: #{_lambda_.16} parent=0 // pred_region
    _
  $region21: #{_lambda_.16} parent=0 // pred_fallthru
    _

// kernel: _lambda_.18
$region0: #{_lambda_.18}
  #allocation0 [shape = 'u32[]', space=smem, size = 0x4, offset = 0x4, fixed_abs, tag = 'smem constant byte address 0x4 - core index']
  #allocation1 [shape = 'u32[144,128]{1,0:T(1,128)}', space=vmem, size = 0x12000, scoped, tag = 'internal scratch']
  %s0 = inlined_call_operand.vmem [shape: bf16[2,8,96], index: 0, kind: input, shape index: {}, may-alias: {0,1}]
  %s1 = inlined_call_operand.vmem [shape: bf16[2,8,96], index: 1, kind: input, shape index: {}, may-alias: {0,1}]
  %s2 = inlined_call_operand.vmem [shape: f32[2,1,8], index: 2, kind: input, shape index: {}]
  %s3 = inlined_call_operand.vmem [shape: bf16[2,8,32], index: 3, kind: output, shape index: {}]
  %s4 = sld [smem:[#allocation0]]
  $region45: #{_lambda_.18} parent=0
    _
  %s6 = ssub.s32 1, %s4
  %s7 = scalar_select 0, %s6, %s4
  loop: start=0, step=1, limit=4
  $region2: #{_lambda_.18} parent=0 // loop_pre_header
    _
  $region3: #{_lambda_.18} parent=0 // loop_header
    %s9 = sphi 0, %s13
    %p10 = scmp.ge.s32.totalorder %s9, 4
    %s16 = sphi 0, %s28
    %s17 = sphi 0, %s24
    %s18 = sphi 0, %s16
    %s19 = sphi 0, %s17
    %s20 = sphi 0, %s18
    %s21 = sphi 0, %s19
    %s33 = sphi 0, %s35
    %s36 = sphi 0, %s33
    %s37 = sphi 0, %s36
    %s53 = sphi 0, %s37
    %s59 = sphi 0, %s61
    %s62 = sphi 0, %s59
    %s63 = sphi 0, %s62
    %s79 = sphi 0, %s63
    %s85 = sphi 0, %s87
    %s88 = sphi 0, %s85
    %s89 = sphi 0, %s88
    %s105 = sphi 0, %s89
    %s113 = sphi 0, %s115
    %s116 = sphi 0, %s113
    %s117 = sphi 0, %s116
    %s133 = sphi 0, %s117
  $region4: #{_lambda_.18} parent=0 // loop_header_branch
    %12 = sbr.rel (%p10) target = $region8
  $region5: #{_lambda_.18} parent=0 // loop_body
    %s14 = ssub.s32 %s9, 1
    %s15 = ssub.s32 %s9, 2
    %s22 = sadd.s32 1, %s17
    %p23 = scmp.ge.s32.totalorder %s22, 1
    %s24 = scalar_select %p23, 0, %s22
    %s25 = sadd.s32 1, %s16
    %s26 = scalar_select %p23, %s25, %s16
    %p27 = scmp.ge.s32.totalorder %s26, 2
    %s28 = scalar_select %p27, 0, %s26
    %s29 = ssub.s32 %s16, %s28
    %s30 = ssub.s32 %s17, %s24
    %s31 = sor.u32 %s29, %s30
    %p32 = scmp.eq.s32.totalorder %s31, 0
    %s34 = sadd.s32 %s33, 1
    %s35 = scalar_select %p32, %s33, %s34
    %p38 = pneg %p32
    %p39 = scmp.eq.s32.totalorder %s9, 1
    %p40 = por %p38, %p39
    %p41 = scmp.ne.s32.totalorder %s33, %s36
    %p42 = scmp.eq.s32.totalorder %s9, 0
    %p43 = por %p41, %p42
    %p44 = scmp.ne.s32.totalorder %s33, %s36
    %p45 = scmp.eq.s32.totalorder %s14, 1
    %p46 = por %p44, %p45
    %p47 = scmp.ne.s32.totalorder %s36, %s37
    %p48 = scmp.eq.s32.totalorder %s14, 0
    %p49 = por %p47, %p48
    %p50 = scmp.ne.s32.totalorder %s36, %s37
    %p51 = scmp.eq.s32.totalorder %s15, 1
    %p52 = por %p50, %p51
    %p54 = scmp.ne.s32.totalorder %s37, %s53
    %p55 = scmp.eq.s32.totalorder %s15, 0
    %p56 = por %p54, %p55
    %s57 = ssub.s32 %s16, %s28
    %p58 = scmp.eq.s32.totalorder %s57, 0
    %s60 = sadd.s32 %s59, 1
    %s61 = scalar_select %p58, %s59, %s60
    %p64 = pneg %p58
    %p65 = scmp.eq.s32.totalorder %s9, 1
    %p66 = por %p64, %p65
    %p67 = scmp.ne.s32.totalorder %s59, %s62
    %p68 = scmp.eq.s32.totalorder %s9, 0
    %p69 = por %p67, %p68
    %p70 = scmp.ne.s32.totalorder %s59, %s62
    %p71 = scmp.eq.s32.totalorder %s14, 1
    %p72 = por %p70, %p71
    %p73 = scmp.ne.s32.totalorder %s62, %s63
    %p74 = scmp.eq.s32.totalorder %s14, 0
    %p75 = por %p73, %p74
    %p76 = scmp.ne.s32.totalorder %s62, %s63
    %p77 = scmp.eq.s32.totalorder %s15, 1
    %p78 = por %p76, %p77
    %p80 = scmp.ne.s32.totalorder %s63, %s79
    %p81 = scmp.eq.s32.totalorder %s15, 0
    %p82 = por %p80, %p81
    %s83 = ssub.s32 %s16, %s28
    %p84 = scmp.eq.s32.totalorder %s83, 0
    %s86 = sadd.s32 %s85, 1
    %s87 = scalar_select %p84, %s85, %s86
    %p90 = pneg %p84
    %p91 = scmp.eq.s32.totalorder %s9, 1
    %p92 = por %p90, %p91
    %p93 = scmp.ne.s32.totalorder %s85, %s88
    %p94 = scmp.eq.s32.totalorder %s9, 0
    %p95 = por %p93, %p94
    %p96 = scmp.ne.s32.totalorder %s85, %s88
    %p97 = scmp.eq.s32.totalorder %s14, 1
    %p98 = por %p96, %p97
    %p99 = scmp.ne.s32.totalorder %s88, %s89
    %p100 = scmp.eq.s32.totalorder %s14, 0
    %p101 = por %p99, %p100
    %p102 = scmp.ne.s32.totalorder %s88, %s89
    %p103 = scmp.eq.s32.totalorder %s15, 1
    %p104 = por %p102, %p103
    %p106 = scmp.ne.s32.totalorder %s89, %s105
    %p107 = scmp.eq.s32.totalorder %s15, 0
    %p108 = por %p106, %p107
    %s109 = ssub.s32 %s16, %s28
    %s110 = ssub.s32 %s17, %s24
    %s111 = sor.u32 %s109, %s110
    %p112 = scmp.eq.s32.totalorder %s111, 0
    %s114 = sadd.s32 %s113, 1
    %s115 = scalar_select %p112, %s113, %s114
    %p118 = pneg %p112
    %p119 = scmp.eq.s32.totalorder %s9, 1
    %p120 = por %p118, %p119
    %p121 = scmp.ne.s32.totalorder %s113, %s116
    %p122 = scmp.eq.s32.totalorder %s9, 0
    %p123 = por %p121, %p122
    %p124 = scmp.ne.s32.totalorder %s113, %s116
    %p125 = scmp.eq.s32.totalorder %s14, 1
    %p126 = por %p124, %p125
    %p127 = scmp.ne.s32.totalorder %s116, %s117
    %p128 = scmp.eq.s32.totalorder %s14, 0
    %p129 = por %p127, %p128
    %p130 = scmp.ne.s32.totalorder %s116, %s117
    %p131 = scmp.eq.s32.totalorder %s15, 1
    %p132 = por %p130, %p131
    %p134 = scmp.ne.s32.totalorder %s117, %s133
    %p135 = scmp.eq.s32.totalorder %s15, 0
    %p136 = por %p134, %p135
    %p137 = scmp.le.s32.totalorder 1, %s9
    %p138 = scmp.lt.s32.totalorder %s9, 3
    %p139 = pnand %p137, %p138
    %p140 = pneg %p139
    // Predicated region
    $region9: #{_lambda_.18} parent=5 // pred_check
      _
    $region10: #{_lambda_.18} parent=5 // pred_check_branch
      %142 = sbr.rel (%p139) target = $region12
    $region11: #{_lambda_.18} parent=5 // pred_region
      %s143 = ssub.s32 %s9, 1
    $region12: #{_lambda_.18} parent=5 // pred_fallthru
      _
    %p144 = scmp.lt.s32.totalorder %s9, 2
    // Predicated region
    $region13: #{_lambda_.18} parent=5 // pred_check
      %p145 = pneg %p144
    $region14: #{_lambda_.18} parent=5 // pred_check_branch
      %147 = sbr.rel (%p145) target = $region16
    $region15: #{_lambda_.18} parent=5 // pred_region
      // Predicated region
      $region17: #{_lambda_.18} parent=15 // pred_check
        %p148 = pneg %p43
      $region18: #{_lambda_.18} parent=15 // pred_check_branch
        %150 = sbr.rel (%p148) target = $region20
      $region19: #{_lambda_.18} parent=15 // pred_region
        %p151 = scmp.lt.s32.totalorder %s16, 1
        %s152 = scalar_select %p151, %s16, 1
        %p153 = scmp.lt.s32.totalorder %s17, 0
        %s154 = scalar_select %p153, %s17, 0
        %s155 = sadd.s32 %s154, %s152
        %s156 = smul.addr %s155, 4
        %s157 = scalar_lea.vmem %s0, %s156
      $region20: #{_lambda_.18} parent=15 // pred_fallthru
        _
      // Predicated region
      $region21: #{_lambda_.18} parent=15 // pred_check
        %p158 = pneg %p69
      $region22: #{_lambda_.18} parent=15 // pred_check_branch
        %160 = sbr.rel (%p158) target = $region24
      $region23: #{_lambda_.18} parent=15 // pred_region
        %p161 = scmp.lt.s32.totalorder %s16, 1
        %s162 = scalar_select %p161, %s16, 1
        %s163 = smul.addr %s162, 4
        %s164 = scalar_lea.vmem %s1, %s163
      $region24: #{_lambda_.18} parent=15 // pred_fallthru
        _
      // Predicated region
      $region25: #{_lambda_.18} parent=15 // pred_check
        %p165 = pneg %p95
      $region26: #{_lambda_.18} parent=15 // pred_check_branch
        %167 = sbr.rel (%p165) target = $region28
      $region27: #{_lambda_.18} parent=15 // pred_region
        %p168 = scmp.lt.s32.totalorder %s16, 1
        %s169 = scalar_select %p168, %s16, 1
        %s170 = scalar_lea.vmem %s2, %s169
      $region28: #{_lambda_.18} parent=15 // pred_fallthru
        _
    $region16: #{_lambda_.18} parent=5 // pred_fallthru
      _
    %p171 = scmp.le.s32.totalorder 1, %s9
    %p172 = scmp.lt.s32.totalorder %s9, 3
    %p173 = pnand %p171, %p172
    %p174 = pneg %p173
    // Predicated region
    $region29: #{_lambda_.18} parent=5 // pred_check
      _
    $region30: #{_lambda_.18} parent=5 // pred_check_branch
      %176 = sbr.rel (%p173) target = $region32
    $region31: #{_lambda_.18} parent=5 // pred_region
      %s177 = ssub.s32 %s9, 1
      %p178 = scmp.lt.s32.totalorder %s18, 1
      %s179 = scalar_select %p178, %s18, 1
      %p180 = scmp.lt.s32.totalorder %s19, 0
      %s181 = scalar_select %p180, %s19, 0
      %s182 = sadd.s32 %s181, %s179
      %s183 = smul.addr %s182, 4
      %s184 = scalar_lea.vmem %s0, %s183
      %p185 = pneg %p49
      %p186 = pneg %p46
      %p187 = scmp.lt.s32.totalorder %s18, 1
      %s188 = scalar_select %p187, %s18, 1
      %s189 = smul.addr %s188, 4
      %s190 = scalar_lea.vmem %s1, %s189
      %p191 = pneg %p75
      %p192 = pneg %p72
      %p193 = scmp.lt.s32.totalorder %s18, 1
      %s194 = scalar_select %p193, %s18, 1
      %s195 = scalar_lea.vmem %s2, %s194
      %p196 = pneg %p101
      %p197 = pneg %p98
      %p198 = pneg %p129
      %p199 = pneg %p126
      %p200 = scmp.lt.s32.totalorder %s18, 1
      %s201 = scalar_select %p200, %s18, 1
      %p202 = scmp.lt.s32.totalorder %s19, 0
      %s203 = scalar_select %p202, %s19, 0
      %s204 = sadd.s32 %s203, %s201
      %s205 = smul.addr %s204, 4
      %s206 = scalar_lea.vmem %s3, %s205
      %p207 = scmp.lt.s32.totalorder %s18, 1
      %s208 = scalar_select %p207, %s18, 1
      %p209 = scmp.lt.s32.totalorder %s19, 0
      %s210 = scalar_select %p209, %s19, 0
      %s211 = sadd.s32 %s210, %s208
      %s212 = smul.addr %s211, 4
      %s213 = scalar_lea.vmem %s0, %s212
      %p214 = scmp.lt.s32.totalorder %s18, 1
      %s215 = scalar_select %p214, %s18, 1
      %s216 = smul.addr %s215, 4
      %s217 = scalar_lea.vmem %s1, %s216
      %p218 = scmp.lt.s32.totalorder %s18, 1
      %s219 = scalar_select %p218, %s18, 1
      %s220 = scalar_lea.vmem %s2, %s219
      %p221 = scmp.lt.s32.totalorder %s18, 1
      %s222 = scalar_select %p221, %s18, 1
      %p223 = scmp.lt.s32.totalorder %s19, 0
      %s224 = scalar_select %p223, %s19, 0
      %s225 = sadd.s32 %s224, %s222
      %s226 = smul.addr %s225, 4
      %s227 = scalar_lea.vmem %s3, %s226
      %v229 = vld [vmem:[%s220] sm:$0x1]
      %v230 = vld [vmem:[%s213] sm:$0xf]
      %v231 = vld [vmem:[%s217] sm:$0xf]
      %v233 = vunpack.c.l.b16 %v231
      %v234 = vpack.c.b16 %v233, %v233
      %235 = vrot.lane.b32.xlu0 %v234, 96
      %v236 = vpop.permute.xlu0 %235
      %vm237 = vcmask 64512
      %v239 = vsel %vm237, %v230, 0
      %v242 = vsel %vm237, %v236, 0
      %244 = vmatprep.subr.bf16.mxu0 0
      %245 = vmatpush1.bf16.xpose.msra.mxu0 %v242
      %246 = vmatprep.subr.bf16.mxu0 0
      %247 = vmatpush1.bf16.xpose.msra.mxu0 0
      %248 = vmatprep.subr.bf16.mxu0 0
      %249 = vmatpush1.bf16.xpose.msra.mxu0 0
      %250 = vmatprep.subr.bf16.mxu0 0
      %251 = vmatpush1.bf16.xpose.msra.mxu0 0
      %252 = vmatprep.subr.bf16.mxu0 0
      %253 = vmatpush1.bf16.xpose.msra.mxu0 0
      %254 = vmatprep.subr.bf16.mxu0 0
      %255 = vmatpush1.bf16.xpose.msra.mxu0 0
      %256 = vmatprep.subr.bf16.mxu0 0
      %257 = vmatpush1.bf16.xpose.msra.mxu0 0
      %258 = vmatprep.subr.bf16.mxu0 0
      %259 = vmatpush1.bf16.xpose.msra.mxu0 0
      %260 = vmatprep.subr.bf16.mxu0 0
      %261 = vmatpush1.bf16.xpose.msra.mxu0 0
      %262 = vmatprep.subr.bf16.mxu0 0
      %263 = vmatpush1.bf16.xpose.msra.mxu0 0
      %264 = vmatprep.subr.bf16.mxu0 0
      %265 = vmatpush1.bf16.xpose.msra.mxu0 0
      %266 = vmatprep.subr.bf16.mxu0 0
      %267 = vmatpush1.bf16.xpose.msra.mxu0 0
      %268 = vmatprep.subr.bf16.mxu0 0
      %269 = vmatpush1.bf16.xpose.msra.mxu0 0
      %270 = vmatprep.subr.bf16.mxu0 0
      %271 = vmatpush1.bf16.xpose.msra.mxu0 0
      %272 = vmatprep.subr.bf16.mxu0 0
      %273 = vmatpush1.bf16.xpose.msra.mxu0 0
      %274 = vmatprep.subr.bf16.mxu0 0
      %275 = vmatpush1.bf16.xpose.msra.mxu0 0
      %276 = vmatprep.mubr.bf16.mxu0 0
      %277 = vmatmul.mubr.bf16.gmra.mrb[0].mxu0 %v239
      %v278 = vpop.f32.mrb[0].mxu0
      %v279 = vadd.f32 0.0, %v278
      %v280 = vpop.f32.mrb[0].mxu0
      %v281 = vpop.f32.mrb[0].mxu0
      %v282 = vpop.f32.mrb[0].mxu0
      %283 = vdwg.mxu0
      %v284 = vmul.f32 %v279, 0.35355338
      %v286 = vlaneseq
      %v287 = vshrl.u32 %v286, 7
      %v288 = vsub.s32 0, %v287
      %v289 = vrot.slane %v229, %v288
      %v291 = vadd.f32 %v284, %v289
      %v292 = vsel %vm237, %v291, -inf
      %293 = vmax.xlane.f32.xlu0 %v292
      %v294 = vpop.xlane.xlu0 %293
      %v295 = vsub.f32 %v291, %v294
      %v296 = vmul.f32 %v295, 1.442695
      %v297 = vpow.pop %v296
      %v298 = vsel %vm237, %v297, 0.0
      %299 = vadd.xlane.f32.xlu0 %v298
      %v300 = vpop.xlane.xlu0 %299
      %v301 = vrcp.pop %v300
      %v302 = vmul.f32 %v297, %v301
      %v303 = vpack.c.bf16 %v302, %v302
      %304 = vrot.lane.b32.xlu0 %v234, 64
      %v305 = vpop.permute.xlu0 %304
      %v307 = vsel %vm237, %v303, 0
      %vm309 = vcmask 1043456
      %v311 = vsel %vm309, %v305, 0
      %313 = vmatprep.subr.bf16.mxu0 0
      %314 = vmatpush1.bf16.msra.mxu0 %v311
      %315 = vmatprep.subr.bf16.mxu0 0
      %316 = vmatpush1.bf16.msra.mxu0 0
      %317 = vmatprep.subr.bf16.mxu0 0
      %318 = vmatpush1.bf16.msra.mxu0 0
      %319 = vmatprep.subr.bf16.mxu0 0
      %320 = vmatpush1.bf16.msra.mxu0 0
      %321 = vmatprep.subr.bf16.mxu0 0
      %322 = vmatpush1.bf16.msra.mxu0 0
      %323 = vmatprep.subr.bf16.mxu0 0
      %324 = vmatpush1.bf16.msra.mxu0 0
      %325 = vmatprep.subr.bf16.mxu0 0
      %326 = vmatpush1.bf16.msra.mxu0 0
      %327 = vmatprep.subr.bf16.mxu0 0
      %328 = vmatpush1.bf16.msra.mxu0 0
      %329 = vmatprep.subr.bf16.mxu0 0
      %330 = vmatpush1.bf16.msra.mxu0 0
      %331 = vmatprep.subr.bf16.mxu0 0
      %332 = vmatpush1.bf16.msra.mxu0 0
      %333 = vmatprep.subr.bf16.mxu0 0
      %334 = vmatpush1.bf16.msra.mxu0 0
      %335 = vmatprep.subr.bf16.mxu0 0
      %336 = vmatpush1.bf16.msra.mxu0 0
      %337 = vmatprep.subr.bf16.mxu0 0
      %338 = vmatpush1.bf16.msra.mxu0 0
      %339 = vmatprep.subr.bf16.mxu0 0
      %340 = vmatpush1.bf16.msra.mxu0 0
      %341 = vmatprep.subr.bf16.mxu0 0
      %342 = vmatpush1.bf16.msra.mxu0 0
      %343 = vmatprep.subr.bf16.mxu0 0
      %344 = vmatpush1.bf16.msra.mxu0 0
      %345 = vmatprep.mubr.bf16.mxu0 0
      %346 = vmatmul.mubr.bf16.gmra.mrb[0].mxu0 %v307
      %v347 = vpop.f32.mrb[0].mxu0
      %v348 = vadd.f32 0.0, %v347
      %v349 = vpop.f32.mrb[0].mxu0
      %v350 = vpop.f32.mrb[0].mxu0
      %v351 = vpop.f32.mrb[0].mxu0
      %352 = vdwg.mxu0
      %v354 = vunpack.c.l.b16 %v230
      %v355 = vpack.c.b16 %v354, %v354
      %356 = vrot.lane.b32.xlu0 %v355, 120
      %v357 = vpop.permute.xlu0 %356
      %358 = vrot.lane.b32.xlu0 %v234, 88
      %v359 = vpop.permute.xlu0 %358
      %v361 = vsel %vm237, %v357, 0
      %v364 = vsel %vm237, %v359, 0
      %366 = vmatprep.subr.bf16.mxu0 0
      %367 = vmatpush1.bf16.xpose.msra.mxu0 %v364
      %368 = vmatprep.subr.bf16.mxu0 0
      %369 = vmatpush1.bf16.xpose.msra.mxu0 0
      %370 = vmatprep.subr.bf16.mxu0 0
      %371 = vmatpush1.bf16.xpose.msra.mxu0 0
      %372 = vmatprep.subr.bf16.mxu0 0
      %373 = vmatpush1.bf16.xpose.msra.mxu0 0
      %374 = vmatprep.subr.bf16.mxu0 0
      %375 = vmatpush1.bf16.xpose.msra.mxu0 0
      %376 = vmatprep.subr.bf16.mxu0 0
      %377 = vmatpush1.bf16.xpose.msra.mxu0 0
      %378 = vmatprep.subr.bf16.mxu0 0
      %379 = vmatpush1.bf16.xpose.msra.mxu0 0
      %380 = vmatprep.subr.bf16.mxu0 0
      %381 = vmatpush1.bf16.xpose.msra.mxu0 0
      %382 = vmatprep.subr.bf16.mxu0 0
      %383 = vmatpush1.bf16.xpose.msra.mxu0 0
      %384 = vmatprep.subr.bf16.mxu0 0
      %385 = vmatpush1.bf16.xpose.msra.mxu0 0
      %386 = vmatprep.subr.bf16.mxu0 0
      %387 = vmatpush1.bf16.xpose.msra.mxu0 0
      %388 = vmatprep.subr.bf16.mxu0 0
      %389 = vmatpush1.bf16.xpose.msra.mxu0 0
      %390 = vmatprep.subr.bf16.mxu0 0
      %391 = vmatpush1.bf16.xpose.msra.mxu0 0
      %392 = vmatprep.subr.bf16.mxu0 0
      %393 = vmatpush1.bf16.xpose.msra.mxu0 0
      %394 = vmatprep.subr.bf16.mxu0 0
      %395 = vmatpush1.bf16.xpose.msra.mxu0 0
      %396 = vmatprep.subr.bf16.mxu0 0
      %397 = vmatpush1.bf16.xpose.msra.mxu0 0
      %398 = vmatprep.mubr.bf16.mxu0 0
      %399 = vmatmul.mubr.bf16.gmra.mrb[0].mxu0 %v361
      %v400 = vpop.f32.mrb[0].mxu0
      %v401 = vadd.f32 0.0, %v400
      %v402 = vpop.f32.mrb[0].mxu0
      %v403 = vpop.f32.mrb[0].mxu0
      %v404 = vpop.f32.mrb[0].mxu0
      %405 = vdwg.mxu0
      %v406 = vmul.f32 %v401, 0.35355338
      %v407 = vadd.f32 %v406, %v289
      %v408 = vsel %vm237, %v407, -inf
      %409 = vmax.xlane.f32.xlu0 %v408
      %v410 = vpop.xlane.xlu0 %409
      %v411 = vsub.f32 %v407, %v410
      %v412 = vmul.f32 %v411, 1.442695
      %v413 = vpow.pop %v412
      %v414 = vsel %vm237, %v413, 0.0
      %415 = vadd.xlane.f32.xlu0 %v414
      %v416 = vpop.xlane.xlu0 %415
      %v417 = vrcp.pop %v416
      %v418 = vmul.f32 %v413, %v417
      %v419 = vpack.c.bf16 %v418, %v418
      %420 = vrot.lane.b32.xlu0 %v234, 56
      %v421 = vpop.permute.xlu0 %420
      %v423 = vsel %vm237, %v419, 0
      %v426 = vsel %vm309, %v421, 0
      %428 = vmatprep.subr.bf16.mxu0 0
      %429 = vmatpush1.bf16.msra.mxu0 %v426
      %430 = vmatprep.subr.bf16.mxu0 0
      %431 = vmatpush1.bf16.msra.mxu0 0
      %432 = vmatprep.subr.bf16.mxu0 0
      %433 = vmatpush1.bf16.msra.mxu0 0
      %434 = vmatprep.subr.bf16.mxu0 0
      %435 = vmatpush1.bf16.msra.mxu0 0
      %436 = vmatprep.subr.bf16.mxu0 0
      %437 = vmatpush1.bf16.msra.mxu0 0
      %438 = vmatprep.subr.bf16.mxu0 0
      %439 = vmatpush1.bf16.msra.mxu0 0
      %440 = vmatprep.subr.bf16.mxu0 0
      %441 = vmatpush1.bf16.msra.mxu0 0
      %442 = vmatprep.subr.bf16.mxu0 0
      %443 = vmatpush1.bf16.msra.mxu0 0
      %444 = vmatprep.subr.bf16.mxu0 0
      %445 = vmatpush1.bf16.msra.mxu0 0
      %446 = vmatprep.subr.bf16.mxu0 0
      %447 = vmatpush1.bf16.msra.mxu0 0
      %448 = vmatprep.subr.bf16.mxu0 0
      %449 = vmatpush1.bf16.msra.mxu0 0
      %450 = vmatprep.subr.bf16.mxu0 0
      %451 = vmatpush1.bf16.msra.mxu0 0
      %452 = vmatprep.subr.bf16.mxu0 0
      %453 = vmatpush1.bf16.msra.mxu0 0
      %454 = vmatprep.subr.bf16.mxu0 0
      %455 = vmatpush1.bf16.msra.mxu0 0
      %456 = vmatprep.subr.bf16.mxu0 0
      %457 = vmatpush1.bf16.msra.mxu0 0
      %458 = vmatprep.subr.bf16.mxu0 0
      %459 = vmatpush1.bf16.msra.mxu0 0
      %460 = vmatprep.mubr.bf16.mxu0 0
      %461 = vmatmul.mubr.bf16.gmra.mrb[0].mxu0 %v423
      %v462 = vpop.f32.mrb[0].mxu0
      %v463 = vadd.f32 0.0, %v462
      %v464 = vpop.f32.mrb[0].mxu0
      %v465 = vpop.f32.mrb[0].mxu0
      %v466 = vpop.f32.mrb[0].mxu0
      %467 = vdwg.mxu0
      %468 = vrot.lane.b32.xlu0 %v355, 112
      %v469 = vpop.permute.xlu0 %468
      %470 = vrot.lane.b32.xlu0 %v234, 80
      %v471 = vpop.permute.xlu0 %470
      %v473 = vsel %vm237, %v469, 0
      %v476 = vsel %vm237, %v471, 0
      %478 = vmatprep.subr.bf16.mxu0 0
      %479 = vmatpush1.bf16.xpose.msra.mxu0 %v476
      %480 = vmatprep.subr.bf16.mxu0 0
      %481 = vmatpush1.bf16.xpose.msra.mxu0 0
      %482 = vmatprep.subr.bf16.mxu0 0
      %483 = vmatpush1.bf16.xpose.msra.mxu0 0
      %484 = vmatprep.subr.bf16.mxu0 0
      %485 = vmatpush1.bf16.xpose.msra.mxu0 0
      %486 = vmatprep.subr.bf16.mxu0 0
      %487 = vmatpush1.bf16.xpose.msra.mxu0 0
      %488 = vmatprep.subr.bf16.mxu0 0
      %489 = vmatpush1.bf16.xpose.msra.mxu0 0
      %490 = vmatprep.subr.bf16.mxu0 0
      %491 = vmatpush1.bf16.xpose.msra.mxu0 0
      %492 = vmatprep.subr.bf16.mxu0 0
      %493 = vmatpush1.bf16.xpose.msra.mxu0 0
      %494 = vmatprep.subr.bf16.mxu0 0
      %495 = vmatpush1.bf16.xpose.msra.mxu0 0
      %496 = vmatprep.subr.bf16.mxu0 0
      %497 = vmatpush1.bf16.xpose.msra.mxu0 0
      %498 = vmatprep.subr.bf16.mxu0 0
      %499 = vmatpush1.bf16.xpose.msra.mxu0 0
      %500 = vmatprep.subr.bf16.mxu0 0
      %501 = vmatpush1.bf16.xpose.msra.mxu0 0
      %502 = vmatprep.subr.bf16.mxu0 0
      %503 = vmatpush1.bf16.xpose.msra.mxu0 0
      %504 = vmatprep.subr.bf16.mxu0 0
      %505 = vmatpush1.bf16.xpose.msra.mxu0 0
      %506 = vmatprep.subr.bf16.mxu0 0
      %507 = vmatpush1.bf16.xpose.msra.mxu0 0
      %508 = vmatprep.subr.bf16.mxu0 0
      %509 = vmatpush1.bf16.xpose.msra.mxu0 0
      %510 = vmatprep.mubr.bf16.mxu0 0
      %511 = vmatmul.mubr.bf16.gmra.mrb[0].mxu0 %v473
      %v512 = vpop.f32.mrb[0].mxu0
      %v513 = vadd.f32 0.0, %v512
      %v514 = vpop.f32.mrb[0].mxu0
      %v515 = vpop.f32.mrb[0].mxu0
      %v516 = vpop.f32.mrb[0].mxu0
      %517 = vdwg.mxu0
      %v518 = vmul.f32 %v513, 0.35355338
      %v519 = vadd.f32 %v518, %v289
      %v520 = vsel %vm237, %v519, -inf
      %521 = vmax.xlane.f32.xlu0 %v520
      %v522 = vpop.xlane.xlu0 %521
      %v523 = vsub.f32 %v519, %v522
      %v524 = vmul.f32 %v523, 1.442695
      %v525 = vpow.pop %v524
      %v526 = vsel %vm237, %v525, 0.0
      %527 = vadd.xlane.f32.xlu0 %v526
      %v528 = vpop.xlane.xlu0 %527
      %v529 = vrcp.pop %v528
      %v530 = vmul.f32 %v525, %v529
      %v531 = vpack.c.bf16 %v530, %v530
      %532 = vrot.lane.b32.xlu0 %v234, 48
      %v533 = vpop.permute.xlu0 %532
      %v535 = vsel %vm237, %v531, 0
      %v538 = vsel %vm309, %v533, 0
      %540 = vmatprep.subr.bf16.mxu0 0
      %541 = vmatpush1.bf16.msra.mxu0 %v538
      %542 = vmatprep.subr.bf16.mxu0 0
      %543 = vmatpush1.bf16.msra.mxu0 0
      %544 = vmatprep.subr.bf16.mxu0 0
      %545 = vmatpush1.bf16.msra.mxu0 0
      %546 = vmatprep.subr.bf16.mxu0 0
      %547 = vmatpush1.bf16.msra.mxu0 0
      %548 = vmatprep.subr.bf16.mxu0 0
      %549 = vmatpush1.bf16.msra.mxu0 0
      %550 = vmatprep.subr.bf16.mxu0 0
      %551 = vmatpush1.bf16.msra.mxu0 0
      %552 = vmatprep.subr.bf16.mxu0 0
      %553 = vmatpush1.bf16.msra.mxu0 0
      %554 = vmatprep.subr.bf16.mxu0 0
      %555 = vmatpush1.bf16.msra.mxu0 0
      %556 = vmatprep.subr.bf16.mxu0 0
      %557 = vmatpush1.bf16.msra.mxu0 0
      %558 = vmatprep.subr.bf16.mxu0 0
      %559 = vmatpush1.bf16.msra.mxu0 0
      %560 = vmatprep.subr.bf16.mxu0 0
      %561 = vmatpush1.bf16.msra.mxu0 0
      %562 = vmatprep.subr.bf16.mxu0 0
      %563 = vmatpush1.bf16.msra.mxu0 0
      %564 = vmatprep.subr.bf16.mxu0 0
      %565 = vmatpush1.bf16.msra.mxu0 0
      %566 = vmatprep.subr.bf16.mxu0 0
      %567 = vmatpush1.bf16.msra.mxu0 0
      %568 = vmatprep.subr.bf16.mxu0 0
      %569 = vmatpush1.bf16.msra.mxu0 0
      %570 = vmatprep.subr.bf16.mxu0 0
      %571 = vmatpush1.bf16.msra.mxu0 0
      %572 = vmatprep.mubr.bf16.mxu0 0
      %573 = vmatmul.mubr.bf16.gmra.mrb[0].mxu0 %v535
      %v574 = vpop.f32.mrb[0].mxu0
      %v575 = vadd.f32 0.0, %v574
      %v576 = vpop.f32.mrb[0].mxu0
      %v577 = vpop.f32.mrb[0].mxu0
      %v578 = vpop.f32.mrb[0].mxu0
      %579 = vdwg.mxu0
      %580 = vrot.lane.b32.xlu0 %v355, 104
      %v581 = vpop.permute.xlu0 %580
      %582 = vrot.lane.b32.xlu0 %v234, 72
      %v583 = vpop.permute.xlu0 %582
      %v585 = vsel %vm237, %v581, 0
      %v588 = vsel %vm237, %v583, 0
      %590 = vmatprep.subr.bf16.mxu0 0
      %591 = vmatpush1.bf16.xpose.msra.mxu0 %v588
      %592 = vmatprep.subr.bf16.mxu0 0
      %593 = vmatpush1.bf16.xpose.msra.mxu0 0
      %594 = vmatprep.subr.bf16.mxu0 0
      %595 = vmatpush1.bf16.xpose.msra.mxu0 0
      %596 = vmatprep.subr.bf16.mxu0 0
      %597 = vmatpush1.bf16.xpose.msra.mxu0 0
      %598 = vmatprep.subr.bf16.mxu0 0
      %599 = vmatpush1.bf16.xpose.msra.mxu0 0
      %600 = vmatprep.subr.bf16.mxu0 0
      %601 = vmatpush1.bf16.xpose.msra.mxu0 0
      %602 = vmatprep.subr.bf16.mxu0 0
      %603 = vmatpush1.bf16.xpose.msra.mxu0 0
      %604 = vmatprep.subr.bf16.mxu0 0
      %605 = vmatpush1.bf16.xpose.msra.mxu0 0
      %606 = vmatprep.subr.bf16.mxu0 0
      %607 = vmatpush1.bf16.xpose.msra.mxu0 0
      %608 = vmatprep.subr.bf16.mxu0 0
      %609 = vmatpush1.bf16.xpose.msra.mxu0 0
      %610 = vmatprep.subr.bf16.mxu0 0
      %611 = vmatpush1.bf16.xpose.msra.mxu0 0
      %612 = vmatprep.subr.bf16.mxu0 0
      %613 = vmatpush1.bf16.xpose.msra.mxu0 0
      %614 = vmatprep.subr.bf16.mxu0 0
      %615 = vmatpush1.bf16.xpose.msra.mxu0 0
      %616 = vmatprep.subr.bf16.mxu0 0
      %617 = vmatpush1.bf16.xpose.msra.mxu0 0
      %618 = vmatprep.subr.bf16.mxu0 0
      %619 = vmatpush1.bf16.xpose.msra.mxu0 0
      %620 = vmatprep.subr.bf16.mxu0 0
      %621 = vmatpush1.bf16.xpose.msra.mxu0 0
      %622 = vmatprep.mubr.bf16.mxu0 0
      %623 = vmatmul.mubr.bf16.gmra.mrb[0].mxu0 %v585
      %v624 = vpop.f32.mrb[0].mxu0
      %v625 = vadd.f32 0.0, %v624
      %v626 = vpop.f32.mrb[0].mxu0
      %v627 = vpop.f32.mrb[0].mxu0
      %v628 = vpop.f32.mrb[0].mxu0
      %629 = vdwg.mxu0
      %v630 = vmul.f32 %v625, 0.35355338
      %v631 = vadd.f32 %v630, %v289
      %v632 = vsel %vm237, %v631, -inf
      %633 = vmax.xlane.f32.xlu0 %v632
      %v634 = vpop.xlane.xlu0 %633
      %v635 = vsub.f32 %v631, %v634
      %v636 = vmul.f32 %v635, 1.442695
      %v637 = vpow.pop %v636
      %v638 = vsel %vm237, %v637, 0.0
      %639 = vadd.xlane.f32.xlu0 %v638
      %v640 = vpop.xlane.xlu0 %639
      %v641 = vrcp.pop %v640
      %v642 = vmul.f32 %v637, %v641
      %v643 = vpack.c.bf16 %v642, %v642
      %644 = vrot.lane.b32.xlu0 %v234, 40
      %v645 = vpop.permute.xlu0 %644
      %v647 = vsel %vm237, %v643, 0
      %v650 = vsel %vm309, %v645, 0
      %652 = vmatprep.subr.bf16.mxu0 0
      %653 = vmatpush1.bf16.msra.mxu0 %v650
      %654 = vmatprep.subr.bf16.mxu0 0
      %655 = vmatpush1.bf16.msra.mxu0 0
      %656 = vmatprep.subr.bf16.mxu0 0
      %657 = vmatpush1.bf16.msra.mxu0 0
      %658 = vmatprep.subr.bf16.mxu0 0
      %659 = vmatpush1.bf16.msra.mxu0 0
      %660 = vmatprep.subr.bf16.mxu0 0
      %661 = vmatpush1.bf16.msra.mxu0 0
      %662 = vmatprep.subr.bf16.mxu0 0
      %663 = vmatpush1.bf16.msra.mxu0 0
      %664 = vmatprep.subr.bf16.mxu0 0
      %665 = vmatpush1.bf16.msra.mxu0 0
      %666 = vmatprep.subr.bf16.mxu0 0
      %667 = vmatpush1.bf16.msra.mxu0 0
      %668 = vmatprep.subr.bf16.mxu0 0
      %669 = vmatpush1.bf16.msra.mxu0 0
      %670 = vmatprep.subr.bf16.mxu0 0
      %671 = vmatpush1.bf16.msra.mxu0 0
      %672 = vmatprep.subr.bf16.mxu0 0
      %673 = vmatpush1.bf16.msra.mxu0 0
      %674 = vmatprep.subr.bf16.mxu0 0
      %675 = vmatpush1.bf16.msra.mxu0 0
      %676 = vmatprep.subr.bf16.mxu0 0
      %677 = vmatpush1.bf16.msra.mxu0 0
      %678 = vmatprep.subr.bf16.mxu0 0
      %679 = vmatpush1.bf16.msra.mxu0 0
      %680 = vmatprep.subr.bf16.mxu0 0
      %681 = vmatpush1.bf16.msra.mxu0 0
      %682 = vmatprep.subr.bf16.mxu0 0
      %683 = vmatpush1.bf16.msra.mxu0 0
      %684 = vmatprep.mubr.bf16.mxu0 0
      %685 = vmatmul.mubr.bf16.gmra.mrb[0].mxu0 %v647
      %v686 = vpop.f32.mrb[0].mxu0
      %v687 = vadd.f32 0.0, %v686
      %v688 = vpop.f32.mrb[0].mxu0
      %v689 = vpop.f32.mrb[0].mxu0
      %v690 = vpop.f32.mrb[0].mxu0
      %691 = vdwg.mxu0
      %693 = vrot.lane.b32.xlu0 %v463, 8
      %v694 = vpop.permute.xlu0 %693
      %697 = vrot.lane.b32.xlu0 %v575, 16
      %v698 = vpop.permute.xlu0 %697
      %701 = vrot.lane.b32.xlu0 %v687, 24
      %v702 = vpop.permute.xlu0 %701
      %v704 = vsel %vm237, %v348, %v694
      %vm705 = vcmask 130048
      %v706 = vsel %vm705, %v704, %v698
      %vm707 = vcmask 195584
      %v708 = vsel %vm707, %v706, %v702
      %v709 = vpack.c.bf16 %v708, %v708
      %vm710 = vcmask 257024
      %711 = vst.msk [vmem:[%s227] sm:$0xf] %vm710, %v709
      %p712 = scmp.lt.s32.totalorder %s18, 1
      %s713 = scalar_select %p712, %s18, 1
      %p714 = scmp.lt.s32.totalorder %s19, 0
      %s715 = scalar_select %p714, %s19, 0
      %s716 = sadd.s32 %s715, %s713
      %s717 = smul.addr %s716, 4
      %s718 = scalar_lea.vmem %s3, %s717
      // Predicated region
      $region33: #{_lambda_.18} parent=31 // pred_check
        %p719 = pneg %p126
      $region34: #{_lambda_.18} parent=31 // pred_check_branch
        %721 = sbr.rel (%p719) target = $region36
      $region35: #{_lambda_.18} parent=31 // pred_region
        _
      $region36: #{_lambda_.18} parent=31 // pred_fallthru
        _
    $region32: #{_lambda_.18} parent=5 // pred_fallthru
      _
    %p722 = scmp.le.s32.totalorder 2, %s9
    // Predicated region
    $region37: #{_lambda_.18} parent=5 // pred_check
      %p723 = pneg %p722
    $region38: #{_lambda_.18} parent=5 // pred_check_branch
      %725 = sbr.rel (%p723) target = $region40
    $region39: #{_lambda_.18} parent=5 // pred_region
      %s726 = ssub.s32 %s9, 2
      // Predicated region
      $region41: #{_lambda_.18} parent=39 // pred_check
        %p727 = pneg %p132
      $region42: #{_lambda_.18} parent=39 // pred_check_branch
        %729 = sbr.rel (%p727) target = $region44
      $region43: #{_lambda_.18} parent=39 // pred_region
        %p730 = scmp.lt.s32.totalorder %s20, 1
        %s731 = scalar_select %p730, %s20, 1
        %p732 = scmp.lt.s32.totalorder %s21, 0
        %s733 = scalar_select %p732, %s21, 0
        %s734 = sadd.s32 %s733, %s731
        %s735 = smul.addr %s734, 4
        %s736 = scalar_lea.vmem %s3, %s735
      $region44: #{_lambda_.18} parent=39 // pred_fallthru
        _
    $region40: #{_lambda_.18} parent=5 // pred_fallthru
      _
  $region6: #{_lambda_.18} parent=0 // loop_footer
    %s13 = sadd.s32 1, %s9
  $region7: #{_lambda_.18} parent=0 // loop_footer_branch
    %8 = sbr.rel target = $region3
  $region8: #{_lambda_.18} parent=0 // loop_exit
    _

// kernel: _lambda_.21
$region0: #{_lambda_.21}
  #allocation0 [shape = 'u32[]', space=smem, size = 0x4, offset = 0x4, fixed_abs, tag = 'smem constant byte address 0x4 - core index']
  #allocation1 [shape = 'u32[144,128]{1,0:T(1,128)}', space=vmem, size = 0x12000, scoped, tag = 'internal scratch']
  #allocation2 [shape = 'f32[16,64]{1,0:T(8,128)}', space=vmem, size = 0x2000, scoped, tag = 'scratch operand']
  %s0 = inlined_call_operand.vmem [shape: bf16[16,32], index: 0, kind: input, shape index: {}]
  %s1 = inlined_call_operand.vmem [shape: bf16[32,64], index: 1, kind: input, shape index: {}]
  %s2 = inlined_call_operand.vmem [shape: f32[1,64], index: 2, kind: input, shape index: {}]
  %s3 = inlined_call_operand.vmem [shape: bf16[16,64], index: 3, kind: output, shape index: {}]
  %s4 = sld [smem:[#allocation0]]
  $region30: #{_lambda_.21} parent=0
    _
  %s6 = ssub.s32 1, %s4
  %s7 = scalar_select 0, %s6, %s4
  // Predicated region
  $region2: #{_lambda_.21} parent=0 // pred_check
    _
  $region3: #{_lambda_.21} parent=0 // pred_check_branch
    %9 = sbr.rel (0) target = $region5
  $region4: #{_lambda_.21} parent=0 // pred_region
    _
  $region5: #{_lambda_.21} parent=0 // pred_fallthru
    _
  // Predicated region
  $region6: #{_lambda_.21} parent=0 // pred_check
    _
  $region7: #{_lambda_.21} parent=0 // pred_check_branch
    %11 = sbr.rel (0) target = $region9
  $region8: #{_lambda_.21} parent=0 // pred_region
    _
  $region9: #{_lambda_.21} parent=0 // pred_fallthru
    _
  // Predicated region
  $region10: #{_lambda_.21} parent=0 // pred_check
    _
  $region11: #{_lambda_.21} parent=0 // pred_check_branch
    %13 = sbr.rel (0) target = $region13
  $region12: #{_lambda_.21} parent=0 // pred_region
    _
  $region13: #{_lambda_.21} parent=0 // pred_fallthru
    _
  %p15 = scmp.eq.s32.totalorder 0, 0
  // Predicated region
  $region14: #{_lambda_.21} parent=0 // pred_check
    %p16 = pneg %p15
  $region15: #{_lambda_.21} parent=0 // pred_check_branch
    %18 = sbr.rel (%p16) target = $region17
  $region16: #{_lambda_.21} parent=0 // pred_region
    %vm19 = vcmask 523264
    %20 = vst.msk [vmem:[#allocation2] sm:$0xff] %vm19, 0.0
    %21 = vst.msk [vmem:[#allocation2 + $0x8] sm:$0xff] %vm19, 0.0
  $region17: #{_lambda_.21} parent=0 // pred_fallthru
    _
  %v22 = vld [vmem:[#allocation2] sm:$0xff]
  %v23 = vld [vmem:[#allocation2 + $0x8] sm:$0xff]
  %v24 = vld [vmem:[%s0] sm:$0xf]
  %v25 = vld [vmem:[%s0 + $0x4] sm:$0xf]
  %v26 = vld [vmem:[%s1] sm:$0xf]
  %v27 = vld [vmem:[%s1 + $0x4] sm:$0xf]
  %v28 = vld [vmem:[%s1 + $0x8] sm:$0xf]
  %v29 = vld [vmem:[%s1 + $0xc] sm:$0xf]
  %v32 = vunpack.c.l.b16 %v24
  %v33 = vunpack.c.l.b16 %v25
  %v34 = vpack.c.b16 %v33, %v32
  %v39 = vunpack.c.l.b16 %v26
  %v40 = vunpack.c.l.b16 %v27
  %v41 = vunpack.c.l.b16 %v28
  %v42 = vunpack.c.l.b16 %v29
  %v43 = vpack.c.b16 %v40, %v39
  %v44 = vpack.c.b16 %v42, %v41
  %vm47 = vcmask 261120
  %v49 = vsel %vm47, %v34, 0
  %51 = vmatprep.subr.bf16.mxu0 0
  %52 = vmatpush1.bf16.msra.mxu0 %v43
  %53 = vmatprep.subr.bf16.mxu0 0
  %54 = vmatpush1.bf16.msra.mxu0 %v44
  %55 = vmatprep.subr.bf16.mxu0 0
  %56 = vmatpush1.bf16.msra.mxu0 0
  %57 = vmatprep.subr.bf16.mxu0 0
  %58 = vmatpush1.bf16.msra.mxu0 0
  %59 = vmatprep.subr.bf16.mxu0 0
  %60 = vmatpush1.bf16.msra.mxu0 0
  %61 = vmatprep.subr.bf16.mxu0 0
  %62 = vmatpush1.bf16.msra.mxu0 0
  %63 = vmatprep.subr.bf16.mxu0 0
  %64 = vmatpush1.bf16.msra.mxu0 0
  %65 = vmatprep.subr.bf16.mxu0 0
  %66 = vmatpush1.bf16.msra.mxu0 0
  %67 = vmatprep.subr.bf16.mxu0 0
  %68 = vmatpush1.bf16.msra.mxu0 0
  %69 = vmatprep.subr.bf16.mxu0 0
  %70 = vmatpush1.bf16.msra.mxu0 0
  %71 = vmatprep.subr.bf16.mxu0 0
  %72 = vmatpush1.bf16.msra.mxu0 0
  %73 = vmatprep.subr.bf16.mxu0 0
  %74 = vmatpush1.bf16.msra.mxu0 0
  %75 = vmatprep.subr.bf16.mxu0 0
  %76 = vmatpush1.bf16.msra.mxu0 0
  %77 = vmatprep.subr.bf16.mxu0 0
  %78 = vmatpush1.bf16.msra.mxu0 0
  %79 = vmatprep.subr.bf16.mxu0 0
  %80 = vmatpush1.bf16.msra.mxu0 0
  %81 = vmatprep.subr.bf16.mxu0 0
  %82 = vmatpush1.bf16.msra.mxu0 0
  %83 = vmatprep.mubr.bf16.mxu0 0
  %84 = vmatmul.mubr.bf16.gmra.mrb[0].mxu0 %v49
  %v85 = vpop.f32.mrb[0].mxu0
  %v86 = vadd.f32 0.0, %v85
  %v87 = vpop.f32.mrb[0].mxu0
  %v88 = vpop.f32.mrb[0].mxu0
  %v89 = vadd.f32 0.0, %v88
  %v90 = vpop.f32.mrb[0].mxu0
  %91 = vdwg.mxu0
  %v92 = vadd.f32 %v22, %v86
  %v93 = vadd.f32 %v23, %v89
  %vm94 = vcmask 523264
  %95 = vst.msk [vmem:[#allocation2] sm:$0xff] %vm94, %v92
  %96 = vst.msk [vmem:[#allocation2 + $0x8] sm:$0xff] %vm94, %v93
  // Predicated region
  $region18: #{_lambda_.21} parent=0 // pred_check
    %p97 = pneg %p15
  $region19: #{_lambda_.21} parent=0 // pred_check_branch
    %99 = sbr.rel (%p97) target = $region21
  $region20: #{_lambda_.21} parent=0 // pred_region
    %v100 = vld [vmem:[#allocation2] sm:$0xff]
    %v101 = vld [vmem:[#allocation2 + $0x8] sm:$0xff]
    %v102 = vld [vmem:[%s2] sm:$0x1]
    %v104 = vlaneseq
    %v105 = vshrl.u32 %v104, 7
    %v106 = vsub.s32 0, %v105
    %v107 = vrot.slane %v102, %v106
    %v109 = vadd.f32 %v100, %v107
    %v110 = vadd.f32 %v101, %v107
    %v111 = vmul.f32 %v109, %v109
    %v112 = vmul.f32 %v110, %v110
    %v113 = vmul.f32 %v109, %v111
    %v114 = vmul.f32 %v110, %v112
    %v115 = vmul.f32 %v113, 0.044715
    %v116 = vmul.f32 %v114, 0.044715
    %v117 = vadd.f32 %v109, %v115
    %v118 = vadd.f32 %v110, %v116
    %v119 = vmul.f32 %v117, 0.7978846
    %v120 = vmul.f32 %v118, 0.7978846
    %v121 = vtanh.pop %v119
    %v122 = vtanh.pop %v120
    %v123 = vadd.f32 %v121, 1.0
    %v124 = vadd.f32 %v122, 1.0
    %v125 = vmul.f32 %v123, 0.5
    %v126 = vmul.f32 %v124, 0.5
    %v127 = vmul.f32 %v109, %v125
    %v128 = vmul.f32 %v110, %v126
    %v129 = vpack.c.bf16 %v128, %v127
    %v131 = vunpack.c.l.b16 %v129
    %v132 = vunpack.c.h.b16 %v129
    %v133 = vpack.c.b16 %v131, %v131
    %v134 = vpack.c.b16 %v132, %v132
    %vm137 = vcmask 519168
    %138 = vst.msk [vmem:[%s3] sm:$0xf] %vm137, %v133
    %139 = vst.msk [vmem:[%s3 + $0x4] sm:$0xf] %vm137, %v134
  $region21: #{_lambda_.21} parent=0 // pred_fallthru
    _
  // Predicated region
  $region22: #{_lambda_.21} parent=0 // pred_check
    _
  $region23: #{_lambda_.21} parent=0 // pred_check_branch
    %141 = sbr.rel (0) target = $region25
  $region24: #{_lambda_.21} parent=0 // pred_region
    _
  $region25: #{_lambda_.21} parent=0 // pred_fallthru
    _
  // Predicated region
  $region26: #{_lambda_.21} parent=0 // pred_check
    _
  $region27: #{_lambda_.21} parent=0 // pred_check_branch
    %143 = sbr.rel (0) target = $region29
  $region28: #{_lambda_.21} parent=0 // pred_region
    _
  $region29: #{_lambda_.21} parent=0 // pred_fallthru
    _

// kernel: _lambda_.20
$region0: #{_lambda_.20}
  #allocation0 [shape = 'u32[]', space=smem, size = 0x4, offset = 0x4, fixed_abs, tag = 'smem constant byte address 0x4 - core index']
  #allocation1 [shape = 'u32[144,128]{1,0:T(1,128)}', space=vmem, size = 0x12000, scoped, tag = 'internal scratch']
  %s0 = inlined_call_operand.vmem [shape: f32[16,32], index: 0, kind: input, shape index: {}]
  %s1 = inlined_call_operand.vmem [shape: bf16[16,32], index: 1, kind: input, shape index: {}]
  %s2 = inlined_call_operand.vmem [shape: f32[1,32], index: 2, kind: input, shape index: {}]
  %s3 = inlined_call_operand.vmem [shape: f32[1,32], index: 3, kind: input, shape index: {}]
  %s4 = inlined_call_operand.vmem [shape: f32[16,32], index: 4, kind: output, shape index: {}]
  %s5 = sld [smem:[#allocation0]]
  $region26: #{_lambda_.20} parent=0
    _
  %s7 = ssub.s32 1, %s5
  %s8 = scalar_select 0, %s7, %s5
  // Predicated region
  $region2: #{_lambda_.20} parent=0 // pred_check
    _
  $region3: #{_lambda_.20} parent=0 // pred_check_branch
    %10 = sbr.rel (0) target = $region5
  $region4: #{_lambda_.20} parent=0 // pred_region
    _
  $region5: #{_lambda_.20} parent=0 // pred_fallthru
    _
  // Predicated region
  $region6: #{_lambda_.20} parent=0 // pred_check
    _
  $region7: #{_lambda_.20} parent=0 // pred_check_branch
    %12 = sbr.rel (0) target = $region9
  $region8: #{_lambda_.20} parent=0 // pred_region
    _
  $region9: #{_lambda_.20} parent=0 // pred_fallthru
    _
  // Predicated region
  $region10: #{_lambda_.20} parent=0 // pred_check
    _
  $region11: #{_lambda_.20} parent=0 // pred_check_branch
    %14 = sbr.rel (0) target = $region13
  $region12: #{_lambda_.20} parent=0 // pred_region
    _
  $region13: #{_lambda_.20} parent=0 // pred_fallthru
    _
  // Predicated region
  $region14: #{_lambda_.20} parent=0 // pred_check
    _
  $region15: #{_lambda_.20} parent=0 // pred_check_branch
    %16 = sbr.rel (0) target = $region17
  $region16: #{_lambda_.20} parent=0 // pred_region
    _
  $region17: #{_lambda_.20} parent=0 // pred_fallthru
    _
  %v17 = vld [vmem:[%s0] sm:$0xff]
  %v18 = vld [vmem:[%s0 + $0x8] sm:$0xff]
  %v19 = vld [vmem:[%s1] sm:$0xf]
  %v20 = vld [vmem:[%s1 + $0x4] sm:$0xf]
  %v21 = vunpack.c.l.bf16 %v19
  %v22 = vunpack.c.l.bf16 %v20
  %v23 = vadd.f32 %v17, %v21
  %v24 = vadd.f32 %v18, %v22
  %vm25 = vcmask 261120
  %v26 = vsel %vm25, %v23, 0.0
  %27 = vadd.xlane.f32.xlu0 %v26
  %v28 = vpop.xlane.xlu0 %27
  %v29 = vsel %vm25, %v24, 0.0
  %30 = vadd.xlane.f32.xlu0 %v29
  %v31 = vpop.xlane.xlu0 %30
  %v32 = vrcp.pop 32.0
  %v33 = vmul.f32 %v28, %v32
  %v34 = vmul.f32 %v31, %v32
  %v35 = vsub.f32 %v23, %v33
  %v36 = vsub.f32 %v24, %v34
  %v37 = vmul.f32 %v35, %v35
  %v38 = vmul.f32 %v36, %v36
  %v39 = vsel %vm25, %v37, 0.0
  %40 = vadd.xlane.f32.xlu0 %v39
  %v41 = vpop.xlane.xlu0 %40
  %v42 = vsel %vm25, %v38, 0.0
  %43 = vadd.xlane.f32.xlu0 %v42
  %v44 = vpop.xlane.xlu0 %43
  %v45 = vmul.f32 %v41, %v32
  %v46 = vmul.f32 %v44, %v32
  %v47 = vadd.f32 %v45, 1e-12
  %v48 = vadd.f32 %v46, 1e-12
  %v49 = vrsqrt.pop %v47
  %v50 = vrsqrt.pop %v48
  %v51 = vmul.f32 %v35, %v49
  %v52 = vmul.f32 %v36, %v50
  %v53 = vld [vmem:[%s2] sm:$0x1]
  %v55 = vlaneseq
  %v56 = vshrl.u32 %v55, 7
  %v57 = vsub.s32 0, %v56
  %v58 = vrot.slane %v53, %v57
  %v60 = vmul.f32 %v51, %v58
  %v61 = vmul.f32 %v52, %v58
  %v62 = vld [vmem:[%s3] sm:$0x1]
  %v64 = vlaneseq
  %v65 = vshrl.u32 %v64, 7
  %v66 = vsub.s32 0, %v65
  %v67 = vrot.slane %v62, %v66
  %v69 = vadd.f32 %v60, %v67
  %v70 = vadd.f32 %v61, %v67
  %71 = vst.msk [vmem:[%s4] sm:$0xff] %vm25, %v69
  %72 = vst.msk [vmem:[%s4 + $0x8] sm:$0xff] %vm25, %v70
  // Predicated region
  $region18: #{_lambda_.20} parent=0 // pred_check
    _
  $region19: #{_lambda_.20} parent=0 // pred_check_branch
    %74 = sbr.rel (0) target = $region21
  $region20: #{_lambda_.20} parent=0 // pred_region
    _
  $region21: #{_lambda_.20} parent=0 // pred_fallthru
    _
  // Predicated region
  $region22: #{_lambda_.20} parent=0 // pred_check
    _
  $region23: #{_lambda_.20} parent=0 // pred_check_branch
    %76 = sbr.rel (0) target = $region25
  $region24: #{_lambda_.20} parent=0 // pred_region
    _
  $region25: #{_lambda_.20} parent=0 // pred_fallthru
    _

// kernel: _lambda_.22
$region0: #{_lambda_.22}
  #allocation0 [shape = 'u32[]', space=smem, size = 0x4, offset = 0x4, fixed_abs, tag = 'smem constant byte address 0x4 - core index']
  #allocation1 [shape = 'u32[144,128]{1,0:T(1,128)}', space=vmem, size = 0x12000, scoped, tag = 'internal scratch']
  #allocation2 [shape = 'f32[16,32]{1,0:T(8,128)}', space=vmem, size = 0x2000, scoped, tag = 'scratch operand']
  %s0 = inlined_call_operand.vmem [shape: bf16[16,64], index: 0, kind: input, shape index: {}]
  %s1 = inlined_call_operand.vmem [shape: bf16[64,32], index: 1, kind: input, shape index: {}]
  %s2 = inlined_call_operand.vmem [shape: f32[1,32], index: 2, kind: input, shape index: {}]
  %s3 = inlined_call_operand.vmem [shape: bf16[16,32], index: 3, kind: output, shape index: {}]
  %s4 = sld [smem:[#allocation0]]
  $region30: #{_lambda_.22} parent=0
    _
  %s6 = ssub.s32 1, %s4
  %s7 = scalar_select 0, %s6, %s4
  // Predicated region
  $region2: #{_lambda_.22} parent=0 // pred_check
    _
  $region3: #{_lambda_.22} parent=0 // pred_check_branch
    %9 = sbr.rel (0) target = $region5
  $region4: #{_lambda_.22} parent=0 // pred_region
    _
  $region5: #{_lambda_.22} parent=0 // pred_fallthru
    _
  // Predicated region
  $region6: #{_lambda_.22} parent=0 // pred_check
    _
  $region7: #{_lambda_.22} parent=0 // pred_check_branch
    %11 = sbr.rel (0) target = $region9
  $region8: #{_lambda_.22} parent=0 // pred_region
    _
  $region9: #{_lambda_.22} parent=0 // pred_fallthru
    _
  // Predicated region
  $region10: #{_lambda_.22} parent=0 // pred_check
    _
  $region11: #{_lambda_.22} parent=0 // pred_check_branch
    %13 = sbr.rel (0) target = $region13
  $region12: #{_lambda_.22} parent=0 // pred_region
    _
  $region13: #{_lambda_.22} parent=0 // pred_fallthru
    _
  %p15 = scmp.eq.s32.totalorder 0, 0
  // Predicated region
  $region14: #{_lambda_.22} parent=0 // pred_check
    %p16 = pneg %p15
  $region15: #{_lambda_.22} parent=0 // pred_check_branch
    %18 = sbr.rel (%p16) target = $region17
  $region16: #{_lambda_.22} parent=0 // pred_region
    %vm19 = vcmask 261120
    %20 = vst.msk [vmem:[#allocation2] sm:$0xff] %vm19, 0.0
    %21 = vst.msk [vmem:[#allocation2 + $0x8] sm:$0xff] %vm19, 0.0
  $region17: #{_lambda_.22} parent=0 // pred_fallthru
    _
  %v22 = vld [vmem:[#allocation2] sm:$0xff]
  %v23 = vld [vmem:[#allocation2 + $0x8] sm:$0xff]
  %v24 = vld [vmem:[%s0] sm:$0xf]
  %v25 = vld [vmem:[%s0 + $0x4] sm:$0xf]
  %v26 = vld [vmem:[%s1] sm:$0xf]
  %v27 = vld [vmem:[%s1 + $0x4] sm:$0xf]
  %v28 = vld [vmem:[%s1 + $0x8] sm:$0xf]
  %v29 = vld [vmem:[%s1 + $0xc] sm:$0xf]
  %v30 = vld [vmem:[%s1 + $0x10] sm:$0xf]
  %v31 = vld [vmem:[%s1 + $0x14] sm:$0xf]
  %v32 = vld [vmem:[%s1 + $0x18] sm:$0xf]
  %v33 = vld [vmem:[%s1 + $0x1c] sm:$0xf]
  %v36 = vunpack.c.l.b16 %v24
  %v37 = vunpack.c.l.b16 %v25
  %v38 = vpack.c.b16 %v37, %v36
  %v47 = vunpack.c.l.b16 %v26
  %v48 = vunpack.c.l.b16 %v27
  %v49 = vunpack.c.l.b16 %v28
  %v50 = vunpack.c.l.b16 %v29
  %v51 = vunpack.c.l.b16 %v30
  %v52 = vunpack.c.l.b16 %v31
  %v53 = vunpack.c.l.b16 %v32
  %v54 = vunpack.c.l.b16 %v33
  %v55 = vpack.c.b16 %v48, %v47
  %v56 = vpack.c.b16 %v50, %v49
  %v57 = vpack.c.b16 %v52, %v51
  %v58 = vpack.c.b16 %v54, %v53
  %vm63 = vcmask 523264
  %v65 = vsel %vm63, %v38, 0
  %67 = vmatprep.subr.bf16.mxu0 0
  %68 = vmatpush1.bf16.msra.mxu0 %v55
  %69 = vmatprep.subr.bf16.mxu0 0
  %70 = vmatpush1.bf16.msra.mxu0 %v56
  %71 = vmatprep.subr.bf16.mxu0 0
  %72 = vmatpush1.bf16.msra.mxu0 %v57
  %73 = vmatprep.subr.bf16.mxu0 0
  %74 = vmatpush1.bf16.msra.mxu0 %v58
  %75 = vmatprep.subr.bf16.mxu0 0
  %76 = vmatpush1.bf16.msra.mxu0 0
  %77 = vmatprep.subr.bf16.mxu0 0
  %78 = vmatpush1.bf16.msra.mxu0 0
  %79 = vmatprep.subr.bf16.mxu0 0
  %80 = vmatpush1.bf16.msra.mxu0 0
  %81 = vmatprep.subr.bf16.mxu0 0
  %82 = vmatpush1.bf16.msra.mxu0 0
  %83 = vmatprep.subr.bf16.mxu0 0
  %84 = vmatpush1.bf16.msra.mxu0 0
  %85 = vmatprep.subr.bf16.mxu0 0
  %86 = vmatpush1.bf16.msra.mxu0 0
  %87 = vmatprep.subr.bf16.mxu0 0
  %88 = vmatpush1.bf16.msra.mxu0 0
  %89 = vmatprep.subr.bf16.mxu0 0
  %90 = vmatpush1.bf16.msra.mxu0 0
  %91 = vmatprep.subr.bf16.mxu0 0
  %92 = vmatpush1.bf16.msra.mxu0 0
  %93 = vmatprep.subr.bf16.mxu0 0
  %94 = vmatpush1.bf16.msra.mxu0 0
  %95 = vmatprep.subr.bf16.mxu0 0
  %96 = vmatpush1.bf16.msra.mxu0 0
  %97 = vmatprep.subr.bf16.mxu0 0
  %98 = vmatpush1.bf16.msra.mxu0 0
  %99 = vmatprep.mubr.bf16.mxu0 0
  %100 = vmatmul.mubr.bf16.gmra.mrb[0].mxu0 %v65
  %v101 = vpop.f32.mrb[0].mxu0
  %v102 = vadd.f32 0.0, %v101
  %v103 = vpop.f32.mrb[0].mxu0
  %v104 = vpop.f32.mrb[0].mxu0
  %v105 = vadd.f32 0.0, %v104
  %v106 = vpop.f32.mrb[0].mxu0
  %107 = vdwg.mxu0
  %v108 = vadd.f32 %v22, %v102
  %v109 = vadd.f32 %v23, %v105
  %vm110 = vcmask 261120
  %111 = vst.msk [vmem:[#allocation2] sm:$0xff] %vm110, %v108
  %112 = vst.msk [vmem:[#allocation2 + $0x8] sm:$0xff] %vm110, %v109
  // Predicated region
  $region18: #{_lambda_.22} parent=0 // pred_check
    %p113 = pneg %p15
  $region19: #{_lambda_.22} parent=0 // pred_check_branch
    %115 = sbr.rel (%p113) target = $region21
  $region20: #{_lambda_.22} parent=0 // pred_region
    %v116 = vld [vmem:[#allocation2] sm:$0xff]
    %v117 = vld [vmem:[#allocation2 + $0x8] sm:$0xff]
    %v118 = vld [vmem:[%s2] sm:$0x1]
    %v120 = vlaneseq
    %v121 = vshrl.u32 %v120, 7
    %v122 = vsub.s32 0, %v121
    %v123 = vrot.slane %v118, %v122
    %v125 = vadd.f32 %v116, %v123
    %v126 = vadd.f32 %v117, %v123
    %v127 = vpack.c.bf16 %v126, %v125
    %v129 = vunpack.c.l.b16 %v127
    %v130 = vunpack.c.h.b16 %v127
    %v131 = vpack.c.b16 %v129, %v129
    %v132 = vpack.c.b16 %v130, %v130
    %vm135 = vcmask 257024
    %136 = vst.msk [vmem:[%s3] sm:$0xf] %vm135, %v131
    %137 = vst.msk [vmem:[%s3 + $0x4] sm:$0xf] %vm135, %v132
  $region21: #{_lambda_.22} parent=0 // pred_fallthru
    _
  // Predicated region
  $region22: #{_lambda_.22} parent=0 // pred_check
    _
  $region23: #{_lambda_.22} parent=0 // pred_check_branch
    %139 = sbr.rel (0) target = $region25
  $region24: #{_lambda_.22} parent=0 // pred_region
    _
  $region25: #{_lambda_.22} parent=0 // pred_fallthru
    _
  // Predicated region
  $region26: #{_lambda_.22} parent=0 // pred_check
    _
  $region27: #{_lambda_.22} parent=0 // pred_check_branch
    %141 = sbr.rel (0) target = $region29
  $region28: #{_lambda_.22} parent=0 // pred_region
    _
  $region29: #{_lambda_.22} parent=0 // pred_fallthru
    _

// kernel: _lambda_.31
$region0: #{_lambda_.31}
  #allocation0 [shape = 'u32[]', space=smem, size = 0x4, offset = 0x4, fixed_abs, tag = 'smem constant byte address 0x4 - core index']
  #allocation1 [shape = 'u32[144,128]{1,0:T(1,128)}', space=vmem, size = 0x12000, scoped, tag = 'internal scratch']
  #allocation2 [shape = 'f32[16,5]{1,0:T(8,128)}', space=vmem, size = 0x2000, scoped, tag = 'scratch operand']
  %s0 = inlined_call_operand.vmem [shape: bf16[16,32], index: 0, kind: input, shape index: {}]
  %s1 = inlined_call_operand.vmem [shape: bf16[32,5], index: 1, kind: input, shape index: {}]
  %s2 = inlined_call_operand.vmem [shape: f32[1,5], index: 2, kind: input, shape index: {}]
  %s3 = inlined_call_operand.vmem [shape: f32[16,5], index: 3, kind: output, shape index: {}]
  %s4 = sld [smem:[#allocation0]]
  $region30: #{_lambda_.31} parent=0
    _
  %s6 = ssub.s32 1, %s4
  %s7 = scalar_select 0, %s6, %s4
  // Predicated region
  $region2: #{_lambda_.31} parent=0 // pred_check
    _
  $region3: #{_lambda_.31} parent=0 // pred_check_branch
    %9 = sbr.rel (0) target = $region5
  $region4: #{_lambda_.31} parent=0 // pred_region
    _
  $region5: #{_lambda_.31} parent=0 // pred_fallthru
    _
  // Predicated region
  $region6: #{_lambda_.31} parent=0 // pred_check
    _
  $region7: #{_lambda_.31} parent=0 // pred_check_branch
    %11 = sbr.rel (0) target = $region9
  $region8: #{_lambda_.31} parent=0 // pred_region
    _
  $region9: #{_lambda_.31} parent=0 // pred_fallthru
    _
  // Predicated region
  $region10: #{_lambda_.31} parent=0 // pred_check
    _
  $region11: #{_lambda_.31} parent=0 // pred_check_branch
    %13 = sbr.rel (0) target = $region13
  $region12: #{_lambda_.31} parent=0 // pred_region
    _
  $region13: #{_lambda_.31} parent=0 // pred_fallthru
    _
  %p15 = scmp.eq.s32.totalorder 0, 0
  // Predicated region
  $region14: #{_lambda_.31} parent=0 // pred_check
    %p16 = pneg %p15
  $region15: #{_lambda_.31} parent=0 // pred_check_branch
    %18 = sbr.rel (%p16) target = $region17
  $region16: #{_lambda_.31} parent=0 // pred_region
    %vm19 = vcmask 39936
    %20 = vst.msk [vmem:[#allocation2] sm:$0xff] %vm19, 0.0
    %21 = vst.msk [vmem:[#allocation2 + $0x8] sm:$0xff] %vm19, 0.0
  $region17: #{_lambda_.31} parent=0 // pred_fallthru
    _
  %v22 = vld [vmem:[#allocation2] sm:$0xff]
  %v23 = vld [vmem:[#allocation2 + $0x8] sm:$0xff]
  %v24 = vld [vmem:[%s0] sm:$0xf]
  %v25 = vld [vmem:[%s0 + $0x4] sm:$0xf]
  %v26 = vld [vmem:[%s1] sm:$0xf]
  %v27 = vld [vmem:[%s1 + $0x4] sm:$0xf]
  %v28 = vld [vmem:[%s1 + $0x8] sm:$0xf]
  %v29 = vld [vmem:[%s1 + $0xc] sm:$0xf]
  %v32 = vunpack.c.l.b16 %v24
  %v33 = vunpack.c.l.b16 %v25
  %v34 = vpack.c.b16 %v33, %v32
  %v39 = vunpack.c.l.b16 %v26
  %v40 = vunpack.c.l.b16 %v27
  %v41 = vunpack.c.l.b16 %v28
  %v42 = vunpack.c.l.b16 %v29
  %v43 = vpack.c.b16 %v40, %v39
  %v44 = vpack.c.b16 %v42, %v41
  %vm47 = vcmask 261120
  %v49 = vsel %vm47, %v34, 0
  %51 = vmatprep.subr.bf16.mxu0 0
  %52 = vmatpush1.bf16.msra.mxu0 %v43
  %53 = vmatprep.subr.bf16.mxu0 0
  %54 = vmatpush1.bf16.msra.mxu0 %v44
  %55 = vmatprep.subr.bf16.mxu0 0
  %56 = vmatpush1.bf16.msra.mxu0 0
  %57 = vmatprep.subr.bf16.mxu0 0
  %58 = vmatpush1.bf16.msra.mxu0 0
  %59 = vmatprep.subr.bf16.mxu0 0
  %60 = vmatpush1.bf16.msra.mxu0 0
  %61 = vmatprep.subr.bf16.mxu0 0
  %62 = vmatpush1.bf16.msra.mxu0 0
  %63 = vmatprep.subr.bf16.mxu0 0
  %64 = vmatpush1.bf16.msra.mxu0 0
  %65 = vmatprep.subr.bf16.mxu0 0
  %66 = vmatpush1.bf16.msra.mxu0 0
  %67 = vmatprep.subr.bf16.mxu0 0
  %68 = vmatpush1.bf16.msra.mxu0 0
  %69 = vmatprep.subr.bf16.mxu0 0
  %70 = vmatpush1.bf16.msra.mxu0 0
  %71 = vmatprep.subr.bf16.mxu0 0
  %72 = vmatpush1.bf16.msra.mxu0 0
  %73 = vmatprep.subr.bf16.mxu0 0
  %74 = vmatpush1.bf16.msra.mxu0 0
  %75 = vmatprep.subr.bf16.mxu0 0
  %76 = vmatpush1.bf16.msra.mxu0 0
  %77 = vmatprep.subr.bf16.mxu0 0
  %78 = vmatpush1.bf16.msra.mxu0 0
  %79 = vmatprep.subr.bf16.mxu0 0
  %80 = vmatpush1.bf16.msra.mxu0 0
  %81 = vmatprep.subr.bf16.mxu0 0
  %82 = vmatpush1.bf16.msra.mxu0 0
  %83 = vmatprep.mubr.bf16.mxu0 0
  %84 = vmatmul.mubr.bf16.gmra.mrb[0].mxu0 %v49
  %v85 = vpop.f32.mrb[0].mxu0
  %v86 = vadd.f32 0.0, %v85
  %v87 = vpop.f32.mrb[0].mxu0
  %v88 = vpop.f32.mrb[0].mxu0
  %v89 = vadd.f32 0.0, %v88
  %v90 = vpop.f32.mrb[0].mxu0
  %91 = vdwg.mxu0
  %v92 = vadd.f32 %v22, %v86
  %v93 = vadd.f32 %v23, %v89
  %vm94 = vcmask 39936
  %95 = vst.msk [vmem:[#allocation2] sm:$0xff] %vm94, %v92
  %96 = vst.msk [vmem:[#allocation2 + $0x8] sm:$0xff] %vm94, %v93
  // Predicated region
  $region18: #{_lambda_.31} parent=0 // pred_check
    %p97 = pneg %p15
  $region19: #{_lambda_.31} parent=0 // pred_check_branch
    %99 = sbr.rel (%p97) target = $region21
  $region20: #{_lambda_.31} parent=0 // pred_region
    %v100 = vld [vmem:[#allocation2] sm:$0xff]
    %v101 = vld [vmem:[#allocation2 + $0x8] sm:$0xff]
    %v102 = vld [vmem:[%s2] sm:$0x1]
    %v104 = vlaneseq
    %v105 = vshrl.u32 %v104, 7
    %v106 = vsub.s32 0, %v105
    %v107 = vrot.slane %v102, %v106
    %v109 = vadd.f32 %v100, %v107
    %v110 = vadd.f32 %v101, %v107
    %111 = vst.msk [vmem:[%s3] sm:$0xff] %vm94, %v109
    %112 = vst.msk [vmem:[%s3 + $0x8] sm:$0xff] %vm94, %v110
  $region21: #{_lambda_.31} parent=0 // pred_fallthru
    _
  // Predicated region
  $region22: #{_lambda_.31} parent=0 // pred_check
    _
  $region23: #{_lambda_.31} parent=0 // pred_check_branch
    %114 = sbr.rel (0) target = $region25
  $region24: #{_lambda_.31} parent=0 // pred_region
    _
  $region25: #{_lambda_.31} parent=0 // pred_fallthru
    _
  // Predicated region
  $region26: #{_lambda_.31} parent=0 // pred_check
    _
  $region27: #{_lambda_.31} parent=0 // pred_check_branch
    %116 = sbr.rel (0) target = $region29
  $region28: #{_lambda_.31} parent=0 // pred_region
    _
  $region29: #{_lambda_.31} parent=0 // pred_fallthru
    _

</llo_original>
